<compile_context>
chip_gen: v7x
topology: tpu7x:2x2x1
jax: 0.10.0
libtpu: 0.0.40
codegen_flags: <defaults>
</compile_context>

<pallas_src>
import jax
import jax.numpy as jnp
from jax.experimental import pallas as pl
from jax.experimental.pallas import tpu as pltpu

EPS = 1e-5


def _bn_scale_offset(vs, gamma, beta):
    """Training-mode BatchNorm1d folded to per-channel scale/offset.

    vs: list of per-batch (C, T) tiles; gamma/beta: (C, 1).
    One pass: accumulate sum and sum-of-squares, var = E[x^2] - mean^2 (biased).
    Returns (scale, offset), each (C, 1), with bn(x) == x * scale + offset.
    """
    n = len(vs) * vs[0].shape[1]
    s1 = vs[0].sum(axis=1, keepdims=True)
    s2 = (vs[0] * vs[0]).sum(axis=1, keepdims=True)
    for v in vs[1:]:
        s1 = s1 + v.sum(axis=1, keepdims=True)
        s2 = s2 + (v * v).sum(axis=1, keepdims=True)
    mean = s1 * (1.0 / n)
    var = s2 * (1.0 / n) - mean * mean
    scale = jax.lax.rsqrt(var + EPS) * gamma
    offset = beta - mean * scale
    return scale, offset


def _shift_pm1(v, t_idx):
    """Zero-padded +/-1 temporal shifts of a (C, T) tile along the lane (T) axis."""
    T = v.shape[1]
    vm1 = jnp.where(t_idx == 0, 0.0, pltpu.roll(v, 1, 1))          # v[:, t-1], 0 at t=0
    vp1 = jnp.where(t_idx == T - 1, 0.0, pltpu.roll(v, T - 1, 1))  # v[:, t+1], 0 at t=T-1
    return vm1, vp1


def temporal_xception_kernel(x_ref, wstack1_ref, wpw2_ref, dw_ref, cvec_ref, o_ref):
    B, Cin, T = x_ref.shape
    Cout = wpw2_ref.shape[0]
    f32 = jnp.float32

    # ---- unpack packed parameters --------------------------------------
    wstack1 = wstack1_ref[...]                    # (2*Cout, Cin): [w_pw1 ; w_conv]
    w_pw1, w_conv = wstack1[:Cout, :], wstack1[Cout:, :]
    w_pw2 = wpw2_ref[...]                         # (Cout, Cout)
    dw = dw_ref[...]                              # (6, Cmax), channels on lanes
    dw1 = dw[0:3, :Cin]                           # (3, Cin)  sepconv1 depthwise taps
    dw2 = dw[3:6, :Cout]                          # (3, Cout) sepconv2 depthwise taps
    cv = cvec_ref[...]                            # (Cmax, 7), channels on sublanes
    b_conv = cv[:Cout, 0:1]                       # (Cout, 1)
    g1, b1 = cv[:Cin, 1:2], cv[:Cin, 2:3]
    g2, b2 = cv[:Cout, 3:4], cv[:Cout, 4:5]
    g3, b3 = cv[:Cout, 5:6], cv[:Cout, 6:7]

    # ---- fold depthwise taps into the pointwise weights (O(C*Cout)) ----
    w1_prev = w_pw1 * dw1[0:1, :]                 # (Cout, Cin)
    w1_next = w_pw1 * dw1[2:3, :]
    # sepconv1 center tap merged with the residual 1x1 conv -> one matmul.
    w1_mid = jnp.concatenate([w_pw1 * dw1[1:2, :], w_conv], axis=0)   # (2*Cout, Cin)
    w2_prev = w_pw2 * dw2[0:1, :]
    w2_cent = w_pw2 * dw2[1:2, :]
    w2_next = w_pw2 * dw2[2:3, :]

    t_idx = jax.lax.broadcasted_iota(jnp.int32, (1, T), 1)

    def mm(w, v):
        return jnp.dot(w, v, preferred_element_type=f32)

    # ---- bn1: training-mode batch stats over all of (B, T) -------------
    xs = [x_ref[b].astype(f32) for b in range(B)]          # each (Cin, T)
    s1v, o1v = _bn_scale_offset(xs, g1, b1)
    xns = [x * s1v + o1v for x in xs]

    # ---- sepconv1 (fused dw+pw) + residual 1x1 conv in one pass --------
    h1s, x2s = [], []
    for xn in xns:
        xm1, xp1 = _shift_pm1(xn, t_idx)
        mid = mm(w1_mid, xn)                                # (2*Cout, T)
        h1s.append(mm(w1_prev, xm1) + mid[:Cout, :] + mm(w1_next, xp1))
        x2s.append(mid[Cout:, :] + b_conv)

    # ---- relu(bn2) -> sepconv2 (fused dw+pw) ----------------------------
    s2v, o2v = _bn_scale_offset(h1s, g2, b2)
    h2s = []
    for h1 in h1s:
        hr = jnp.maximum(h1 * s2v + o2v, 0.0)
        hm1, hp1 = _shift_pm1(hr, t_idx)
        h2s.append(mm(w2_prev, hm1) + mm(w2_cent, hr) + mm(w2_next, hp1))

    # ---- relu(bn3(x1 + x2)) -> global temporal max-pool -----------------
    zs = [h2 + x2 for h2, x2 in zip(h2s, x2s)]
    s3v, o3v = _bn_scale_offset(zs, g3, b3)
    for b, z in enumerate(zs):
        y = jnp.maximum(z * s3v + o3v, 0.0)                 # (Cout, T)
        o_ref[b] = jnp.max(y, axis=1, keepdims=True).astype(o_ref.dtype)


def _pack_params(params, cin, cout):
    """Pack the 13 tiny parameter tensors into 4 arrays (fewer DMAs / VMEM tiles)."""
    cmax = max(cin, cout)
    f32 = jnp.float32

    def pad_cols(a):
        return jnp.pad(a.astype(f32), ((0, 0), (0, cmax - a.shape[-1])))

    def col(v):
        return jnp.pad(v.astype(f32), (0, cmax - v.shape[0]))[:, None]

    wstack1 = jnp.concatenate([params["w_pw1"], params["w_conv"]], axis=0).astype(f32)
    wpw2 = params["w_pw2"].astype(f32)
    dw_pack = jnp.concatenate([pad_cols(params["w_dw1"]), pad_cols(params["w_dw2"])], axis=0)
    cvec = jnp.concatenate(
        [col(params["b_conv"]),
         col(params["g1"]), col(params["b1"]),
         col(params["g2"]), col(params["b2"]),
         col(params["g3"]), col(params["b3"])], axis=1)
    return wstack1, wpw2, dw_pack, cvec


def temporal_xception(x_nct, params):
    """x_nct: (B, Cin, T) float32 (PyTorch NCT layout). Returns (B, Cout)."""
    B, Cin, T = x_nct.shape
    Cout = params["w_pw2"].shape[0]
    wstack1, wpw2, dw_pack, cvec = _pack_params(params, Cin, Cout)

    vmem = pl.BlockSpec(memory_space=pltpu.MemorySpace.VMEM)
    out = pl.pallas_call(
        temporal_xception_kernel,
        out_shape=jax.ShapeDtypeStruct((B, Cout, 1), jnp.float32),
        in_specs=[vmem] * 5,
        out_specs=vmem,
        compiler_params=pltpu.CompilerParams(vmem_limit_bytes=32 * 1024 * 1024),
    )(x_nct.astype(jnp.float32), wstack1, wpw2, dw_pack, cvec)
    return out.reshape(B, Cout)


def temporal_xception_ref(x_nct, params):
    """Independent pure-JAX reference (two-pass BN, concat-based shifts)."""
    x = jnp.transpose(x_nct, (0, 2, 1)).astype(jnp.float32)   # (B, T, Cin)

    def bn(v, g, b):
        mean = jnp.mean(v, axis=(0, 1), keepdims=True)
        var = jnp.mean((v - mean) ** 2, axis=(0, 1), keepdims=True)
        return (v - mean) * jax.lax.rsqrt(var + EPS) * g + b

    def dw3(v, w):  # w: (3, C)
        zero = jnp.zeros_like(v[:, :1, :])
        vm1 = jnp.concatenate([zero, v[:, :-1, :]], axis=1)
        vp1 = jnp.concatenate([v[:, 1:, :], zero], axis=1)
        return w[0] * vm1 + w[1] * v + w[2] * vp1

    xn = bn(x, params["g1"], params["b1"])
    x2 = xn @ params["w_conv"].T + params["b_conv"]
    h = dw3(xn, params["w_dw1"]) @ params["w_pw1"].T
    h = jnp.maximum(bn(h, params["g2"], params["b2"]), 0.0)
    h = dw3(h, params["w_dw2"]) @ params["w_pw2"].T
    y = jnp.maximum(bn(h + x2, params["g3"], params["b3"]), 0.0)
    return jnp.max(y, axis=1)   # (B, Cout)


def make_params(key, cin, cout):
    ks = jax.random.split(key, 6)
    s = 0.1
    return {
        # SeparableConv1d(cin, cout, k=3, pad=1, bias=False)
        "w_dw1": jax.random.normal(ks[0], (3, cin), jnp.float32) * s,     # depthwise taps
        "w_pw1": jax.random.normal(ks[1], (cout, cin), jnp.float32) * s,  # pointwise (out, in)
        # SeparableConv1d(cout, cout, k=3, pad=1, bias=False)
        "w_dw2": jax.random.normal(ks[2], (3, cout), jnp.float32) * s,
        "w_pw2": jax.random.normal(ks[3], (cout, cout), jnp.float32) * s,
        # Conv1d(cin, cout, k=1) — has bias by default
        "w_conv": jax.random.normal(ks[4], (cout, cin), jnp.float32) * s,
        "b_conv": jax.random.normal(ks[5], (cout,), jnp.float32) * s,
        # BatchNorm affine params — PyTorch default init: weight=1, bias=0
        "g1": jnp.ones((cin,), jnp.float32), "b1": jnp.zeros((cin,), jnp.float32),
        "g2": jnp.ones((cout,), jnp.float32), "b2": jnp.zeros((cout,), jnp.float32),
        "g3": jnp.ones((cout,), jnp.float32), "b3": jnp.zeros((cout,), jnp.float32),
    }


if __name__ == "__main__":
    B, Cin, Cout, T = 2, 4, 8, 16
    key = jax.random.PRNGKey(0)
    kx, kp = jax.random.split(key)

    x = jax.random.normal(kx, (B, Cin, T), jnp.float32)   # PyTorch NCT layout
    params = make_params(kp, Cin, Cout)

    out = jax.block_until_ready(temporal_xception(x, params))
    ref = jax.block_until_ready(temporal_xception_ref(x, params))

    assert out.shape == (B, Cout), out.shape
    assert jnp.allclose(out, ref, atol=1e-3, rtol=1e-3), (out, ref)
    print("KERNEL_OK")
</pallas_src>

<mosaic_0001>
module attributes {stable_mosaic.version = 11 : i64} {
  func.func @temporal_xception_kernel(%arg0: memref<2x4x16xf32, #tpu.memory_space<vmem>>, %arg1: memref<16x4xf32, #tpu.memory_space<vmem>>, %arg2: memref<8x8xf32, #tpu.memory_space<vmem>>, %arg3: memref<6x8xf32, #tpu.memory_space<vmem>>, %arg4: memref<8x7xf32, #tpu.memory_space<vmem>>, %arg5: memref<2x8x1xf32, #tpu.memory_space<vmem>>) attributes {dimension_semantics = [], scalar_prefetch = 0 : i64, scratch_operands = 0 : i64, tpu.core_type = #tpu.core_type<tc>} {
    %c0 = arith.constant 0 : index
    %c0_0 = arith.constant 0 : index
    %0 = vector.load %arg1[%c0, %c0_0] : memref<16x4xf32, #tpu.memory_space<vmem>>, vector<16x4xf32>
    %1 = vector.extract_strided_slice %0 {offsets = [0, 0], sizes = [8, 4], strides = [1, 1]} : vector<16x4xf32> to vector<8x4xf32>
    %2 = vector.extract_strided_slice %0 {offsets = [8, 0], sizes = [8, 4], strides = [1, 1]} : vector<16x4xf32> to vector<8x4xf32>
    %c0_1 = arith.constant 0 : index
    %c0_2 = arith.constant 0 : index
    %3 = vector.load %arg2[%c0_1, %c0_2] : memref<8x8xf32, #tpu.memory_space<vmem>>, vector<8x8xf32>
    %c0_3 = arith.constant 0 : index
    %c0_4 = arith.constant 0 : index
    %4 = vector.load %arg3[%c0_3, %c0_4] : memref<6x8xf32, #tpu.memory_space<vmem>>, vector<6x8xf32>
    %5 = vector.extract_strided_slice %4 {offsets = [0, 0], sizes = [3, 4], strides = [1, 1]} : vector<6x8xf32> to vector<3x4xf32>
    %6 = vector.extract_strided_slice %4 {offsets = [3, 0], sizes = [3, 8], strides = [1, 1]} : vector<6x8xf32> to vector<3x8xf32>
    %c0_5 = arith.constant 0 : index
    %c0_6 = arith.constant 0 : index
    %7 = vector.load %arg4[%c0_5, %c0_6] : memref<8x7xf32, #tpu.memory_space<vmem>>, vector<8x7xf32>
    %8 = vector.extract_strided_slice %7 {offsets = [0, 0], sizes = [8, 1], strides = [1, 1]} : vector<8x7xf32> to vector<8x1xf32>
    %9 = vector.extract_strided_slice %7 {offsets = [0, 1], sizes = [4, 1], strides = [1, 1]} : vector<8x7xf32> to vector<4x1xf32>
    %10 = vector.extract_strided_slice %7 {offsets = [0, 2], sizes = [4, 1], strides = [1, 1]} : vector<8x7xf32> to vector<4x1xf32>
    %11 = vector.extract_strided_slice %7 {offsets = [0, 3], sizes = [8, 1], strides = [1, 1]} : vector<8x7xf32> to vector<8x1xf32>
    %12 = vector.extract_strided_slice %7 {offsets = [0, 4], sizes = [8, 1], strides = [1, 1]} : vector<8x7xf32> to vector<8x1xf32>
    %13 = vector.extract_strided_slice %7 {offsets = [0, 5], sizes = [8, 1], strides = [1, 1]} : vector<8x7xf32> to vector<8x1xf32>
    %14 = vector.extract_strided_slice %7 {offsets = [0, 6], sizes = [8, 1], strides = [1, 1]} : vector<8x7xf32> to vector<8x1xf32>
    %15 = vector.extract_strided_slice %5 {offsets = [0, 0], sizes = [1, 4], strides = [1, 1]} : vector<3x4xf32> to vector<1x4xf32>
    %16 = vector.broadcast %15 : vector<1x4xf32> to vector<8x4xf32>
    %17 = arith.mulf %1, %16 : vector<8x4xf32>
    %18 = vector.extract_strided_slice %5 {offsets = [2, 0], sizes = [1, 4], strides = [1, 1]} : vector<3x4xf32> to vector<1x4xf32>
    %19 = vector.broadcast %18 : vector<1x4xf32> to vector<8x4xf32>
    %20 = arith.mulf %1, %19 : vector<8x4xf32>
    %21 = vector.extract_strided_slice %5 {offsets = [1, 0], sizes = [1, 4], strides = [1, 1]} : vector<3x4xf32> to vector<1x4xf32>
    %22 = vector.broadcast %21 : vector<1x4xf32> to vector<8x4xf32>
    %23 = arith.mulf %1, %22 : vector<8x4xf32>
    %24 = tpu.concatenate %23, %2 in 0 : vector<8x4xf32>, vector<8x4xf32> -> vector<16x4xf32>
    %25 = vector.extract_strided_slice %6 {offsets = [0, 0], sizes = [1, 8], strides = [1, 1]} : vector<3x8xf32> to vector<1x8xf32>
    %26 = vector.broadcast %25 : vector<1x8xf32> to vector<8x8xf32>
    %27 = arith.mulf %3, %26 : vector<8x8xf32>
    %28 = vector.extract_strided_slice %6 {offsets = [1, 0], sizes = [1, 8], strides = [1, 1]} : vector<3x8xf32> to vector<1x8xf32>
    %29 = vector.broadcast %28 : vector<1x8xf32> to vector<8x8xf32>
    %30 = arith.mulf %3, %29 : vector<8x8xf32>
    %31 = vector.extract_strided_slice %6 {offsets = [2, 0], sizes = [1, 8], strides = [1, 1]} : vector<3x8xf32> to vector<1x8xf32>
    %32 = vector.broadcast %31 : vector<1x8xf32> to vector<8x8xf32>
    %33 = arith.mulf %3, %32 : vector<8x8xf32>
    %34 = tpu.iota {dimensions = array<i32: 1>} : vector<1x16xi32>
    %c0_7 = arith.constant 0 : index
    %c0_8 = arith.constant 0 : index
    %c0_9 = arith.constant 0 : index
    %35 = vector.load %arg0[%c0_7, %c0_8, %c0_9] : memref<2x4x16xf32, #tpu.memory_space<vmem>>, vector<1x4x16xf32>
    %36 = vector.shape_cast %35 : vector<1x4x16xf32> to vector<4x16xf32>
    %c1 = arith.constant 1 : index
    %c0_10 = arith.constant 0 : index
    %c0_11 = arith.constant 0 : index
    %37 = vector.load %arg0[%c1, %c0_10, %c0_11] : memref<2x4x16xf32, #tpu.memory_space<vmem>>, vector<1x4x16xf32>
    %38 = vector.shape_cast %37 : vector<1x4x16xf32> to vector<4x16xf32>
    %cst = arith.constant dense<0.000000e+00> : vector<4xf32>
    %39 = vector.multi_reduction <add>, %36, %cst [1] : vector<4x16xf32> to vector<4xf32>
    %40 = vector.shape_cast %39 : vector<4xf32> to vector<4x1xf32>
    %41 = arith.mulf %36, %36 : vector<4x16xf32>
    %cst_12 = arith.constant dense<0.000000e+00> : vector<4xf32>
    %42 = vector.multi_reduction <add>, %41, %cst_12 [1] : vector<4x16xf32> to vector<4xf32>
    %43 = vector.shape_cast %42 : vector<4xf32> to vector<4x1xf32>
    %cst_13 = arith.constant dense<0.000000e+00> : vector<4xf32>
    %44 = vector.multi_reduction <add>, %38, %cst_13 [1] : vector<4x16xf32> to vector<4xf32>
    %45 = vector.shape_cast %44 : vector<4xf32> to vector<4x1xf32>
    %46 = arith.addf %40, %45 : vector<4x1xf32>
    %47 = arith.mulf %38, %38 : vector<4x16xf32>
    %cst_14 = arith.constant dense<0.000000e+00> : vector<4xf32>
    %48 = vector.multi_reduction <add>, %47, %cst_14 [1] : vector<4x16xf32> to vector<4xf32>
    %49 = vector.shape_cast %48 : vector<4xf32> to vector<4x1xf32>
    %50 = arith.addf %43, %49 : vector<4x1xf32>
    %cst_15 = arith.constant 3.125000e-02 : f32
    %51 = vector.broadcast %cst_15 : f32 to vector<4x1xf32>
    %52 = arith.mulf %46, %51 : vector<4x1xf32>
    %cst_16 = arith.constant 3.125000e-02 : f32
    %53 = vector.broadcast %cst_16 : f32 to vector<4x1xf32>
    %54 = arith.mulf %50, %53 : vector<4x1xf32>
    %55 = arith.mulf %52, %52 : vector<4x1xf32>
    %56 = arith.subf %54, %55 : vector<4x1xf32>
    %cst_17 = arith.constant 9.99999974E-6 : f32
    %57 = vector.broadcast %cst_17 : f32 to vector<4x1xf32>
    %58 = arith.addf %56, %57 : vector<4x1xf32>
    %59 = math.rsqrt %58 : vector<4x1xf32>
    %60 = arith.mulf %59, %9 : vector<4x1xf32>
    %61 = arith.mulf %52, %60 : vector<4x1xf32>
    %62 = arith.subf %10, %61 : vector<4x1xf32>
    %63 = vector.broadcast %60 : vector<4x1xf32> to vector<4x16xf32>
    %64 = arith.mulf %36, %63 : vector<4x16xf32>
    %65 = vector.broadcast %62 : vector<4x1xf32> to vector<4x16xf32>
    %66 = arith.addf %64, %65 : vector<4x16xf32>
    %67 = vector.broadcast %60 : vector<4x1xf32> to vector<4x16xf32>
    %68 = arith.mulf %38, %67 : vector<4x16xf32>
    %69 = vector.broadcast %62 : vector<4x1xf32> to vector<4x16xf32>
    %70 = arith.addf %68, %69 : vector<4x16xf32>
    %c0_i32 = arith.constant 0 : i32
    %71 = vector.broadcast %c0_i32 : i32 to vector<1x16xi32>
    %72 = arith.cmpi eq, %34, %71 : vector<1x16xi32>
    %c1_i32 = arith.constant 1 : i32
    %73 = tpu.dynamic_rotate %66 by %c1_i32 dim 1 : vector<4x16xf32>, i32 -> vector<4x16xf32>
    %cst_18 = arith.constant 0.000000e+00 : f32
    %74 = vector.shape_cast %72 : vector<1x16xi1> to vector<1x16xi1>
    %75 = vector.broadcast %74 : vector<1x16xi1> to vector<4x16xi1>
    %76 = vector.broadcast %cst_18 : f32 to vector<4x16xf32>
    %77 = arith.select %75, %76, %73 : vector<4x16xi1>, vector<4x16xf32>
    %c15_i32 = arith.constant 15 : i32
    %78 = vector.broadcast %c15_i32 : i32 to vector<1x16xi32>
    %79 = arith.cmpi eq, %34, %78 : vector<1x16xi32>
    %c15_i32_19 = arith.constant 15 : i32
    %80 = tpu.dynamic_rotate %66 by %c15_i32_19 dim 1 : vector<4x16xf32>, i32 -> vector<4x16xf32>
    %cst_20 = arith.constant 0.000000e+00 : f32
    %81 = vector.shape_cast %79 : vector<1x16xi1> to vector<1x16xi1>
    %82 = vector.broadcast %81 : vector<1x16xi1> to vector<4x16xi1>
    %83 = vector.broadcast %cst_20 : f32 to vector<4x16xf32>
    %84 = arith.select %82, %83, %80 : vector<4x16xi1>, vector<4x16xf32>
    %cst_21 = arith.constant dense<0.000000e+00> : vector<16x16xf32>
    %85 = tpu.matmul %24, %66, %cst_21 {dimension_numbers = #tpu.dot_dimension_numbers<[1], [0], [0], [1], [0, 0, 1, 1], [], []>} : vector<16x4xf32>, vector<4x16xf32>, vector<16x16xf32> -> vector<16x16xf32>
    %cst_22 = arith.constant dense<0.000000e+00> : vector<8x16xf32>
    %86 = tpu.matmul %17, %77, %cst_22 {dimension_numbers = #tpu.dot_dimension_numbers<[1], [0], [0], [1], [0, 0, 1, 1], [], []>} : vector<8x4xf32>, vector<4x16xf32>, vector<8x16xf32> -> vector<8x16xf32>
    %87 = vector.extract_strided_slice %85 {offsets = [0, 0], sizes = [8, 16], strides = [1, 1]} : vector<16x16xf32> to vector<8x16xf32>
    %88 = arith.addf %86, %87 : vector<8x16xf32>
    %cst_23 = arith.constant dense<0.000000e+00> : vector<8x16xf32>
    %89 = tpu.matmul %20, %84, %cst_23 {dimension_numbers = #tpu.dot_dimension_numbers<[1], [0], [0], [1], [0, 0, 1, 1], [], []>} : vector<8x4xf32>, vector<4x16xf32>, vector<8x16xf32> -> vector<8x16xf32>
    %90 = arith.addf %88, %89 : vector<8x16xf32>
    %91 = vector.extract_strided_slice %85 {offsets = [8, 0], sizes = [8, 16], strides = [1, 1]} : vector<16x16xf32> to vector<8x16xf32>
    %92 = vector.broadcast %8 : vector<8x1xf32> to vector<8x16xf32>
    %93 = arith.addf %91, %92 : vector<8x16xf32>
    %c0_i32_24 = arith.constant 0 : i32
    %94 = vector.broadcast %c0_i32_24 : i32 to vector<1x16xi32>
    %95 = arith.cmpi eq, %34, %94 : vector<1x16xi32>
    %c1_i32_25 = arith.constant 1 : i32
    %96 = tpu.dynamic_rotate %70 by %c1_i32_25 dim 1 : vector<4x16xf32>, i32 -> vector<4x16xf32>
    %cst_26 = arith.constant 0.000000e+00 : f32
    %97 = vector.shape_cast %95 : vector<1x16xi1> to vector<1x16xi1>
    %98 = vector.broadcast %97 : vector<1x16xi1> to vector<4x16xi1>
    %99 = vector.broadcast %cst_26 : f32 to vector<4x16xf32>
    %100 = arith.select %98, %99, %96 : vector<4x16xi1>, vector<4x16xf32>
    %c15_i32_27 = arith.constant 15 : i32
    %101 = vector.broadcast %c15_i32_27 : i32 to vector<1x16xi32>
    %102 = arith.cmpi eq, %34, %101 : vector<1x16xi32>
    %c15_i32_28 = arith.constant 15 : i32
    %103 = tpu.dynamic_rotate %70 by %c15_i32_28 dim 1 : vector<4x16xf32>, i32 -> vector<4x16xf32>
    %cst_29 = arith.constant 0.000000e+00 : f32
    %104 = vector.shape_cast %102 : vector<1x16xi1> to vector<1x16xi1>
    %105 = vector.broadcast %104 : vector<1x16xi1> to vector<4x16xi1>
    %106 = vector.broadcast %cst_29 : f32 to vector<4x16xf32>
    %107 = arith.select %105, %106, %103 : vector<4x16xi1>, vector<4x16xf32>
    %cst_30 = arith.constant dense<0.000000e+00> : vector<16x16xf32>
    %108 = tpu.matmul %24, %70, %cst_30 {dimension_numbers = #tpu.dot_dimension_numbers<[1], [0], [0], [1], [0, 0, 1, 1], [], []>} : vector<16x4xf32>, vector<4x16xf32>, vector<16x16xf32> -> vector<16x16xf32>
    %cst_31 = arith.constant dense<0.000000e+00> : vector<8x16xf32>
    %109 = tpu.matmul %17, %100, %cst_31 {dimension_numbers = #tpu.dot_dimension_numbers<[1], [0], [0], [1], [0, 0, 1, 1], [], []>} : vector<8x4xf32>, vector<4x16xf32>, vector<8x16xf32> -> vector<8x16xf32>
    %110 = vector.extract_strided_slice %108 {offsets = [0, 0], sizes = [8, 16], strides = [1, 1]} : vector<16x16xf32> to vector<8x16xf32>
    %111 = arith.addf %109, %110 : vector<8x16xf32>
    %cst_32 = arith.constant dense<0.000000e+00> : vector<8x16xf32>
    %112 = tpu.matmul %20, %107, %cst_32 {dimension_numbers = #tpu.dot_dimension_numbers<[1], [0], [0], [1], [0, 0, 1, 1], [], []>} : vector<8x4xf32>, vector<4x16xf32>, vector<8x16xf32> -> vector<8x16xf32>
    %113 = arith.addf %111, %112 : vector<8x16xf32>
    %114 = vector.extract_strided_slice %108 {offsets = [8, 0], sizes = [8, 16], strides = [1, 1]} : vector<16x16xf32> to vector<8x16xf32>
    %115 = vector.broadcast %8 : vector<8x1xf32> to vector<8x16xf32>
    %116 = arith.addf %114, %115 : vector<8x16xf32>
    %cst_33 = arith.constant dense<0.000000e+00> : vector<8xf32>
    %117 = vector.multi_reduction <add>, %90, %cst_33 [1] : vector<8x16xf32> to vector<8xf32>
    %118 = vector.shape_cast %117 : vector<8xf32> to vector<8x1xf32>
    %119 = arith.mulf %90, %90 : vector<8x16xf32>
    %cst_34 = arith.constant dense<0.000000e+00> : vector<8xf32>
    %120 = vector.multi_reduction <add>, %119, %cst_34 [1] : vector<8x16xf32> to vector<8xf32>
    %121 = vector.shape_cast %120 : vector<8xf32> to vector<8x1xf32>
    %cst_35 = arith.constant dense<0.000000e+00> : vector<8xf32>
    %122 = vector.multi_reduction <add>, %113, %cst_35 [1] : vector<8x16xf32> to vector<8xf32>
    %123 = vector.shape_cast %122 : vector<8xf32> to vector<8x1xf32>
    %124 = arith.addf %118, %123 : vector<8x1xf32>
    %125 = arith.mulf %113, %113 : vector<8x16xf32>
    %cst_36 = arith.constant dense<0.000000e+00> : vector<8xf32>
    %126 = vector.multi_reduction <add>, %125, %cst_36 [1] : vector<8x16xf32> to vector<8xf32>
    %127 = vector.shape_cast %126 : vector<8xf32> to vector<8x1xf32>
    %128 = arith.addf %121, %127 : vector<8x1xf32>
    %cst_37 = arith.constant 3.125000e-02 : f32
    %129 = vector.broadcast %cst_37 : f32 to vector<8x1xf32>
    %130 = arith.mulf %124, %129 : vector<8x1xf32>
    %cst_38 = arith.constant 3.125000e-02 : f32
    %131 = vector.broadcast %cst_38 : f32 to vector<8x1xf32>
    %132 = arith.mulf %128, %131 : vector<8x1xf32>
    %133 = arith.mulf %130, %130 : vector<8x1xf32>
    %134 = arith.subf %132, %133 : vector<8x1xf32>
    %cst_39 = arith.constant 9.99999974E-6 : f32
    %135 = vector.broadcast %cst_39 : f32 to vector<8x1xf32>
    %136 = arith.addf %134, %135 : vector<8x1xf32>
    %137 = math.rsqrt %136 : vector<8x1xf32>
    %138 = arith.mulf %137, %11 : vector<8x1xf32>
    %139 = arith.mulf %130, %138 : vector<8x1xf32>
    %140 = arith.subf %12, %139 : vector<8x1xf32>
    %141 = vector.broadcast %138 : vector<8x1xf32> to vector<8x16xf32>
    %142 = arith.mulf %90, %141 : vector<8x16xf32>
    %143 = vector.broadcast %140 : vector<8x1xf32> to vector<8x16xf32>
    %144 = arith.addf %142, %143 : vector<8x16xf32>
    %cst_40 = arith.constant 0.000000e+00 : f32
    %145 = vector.broadcast %cst_40 : f32 to vector<8x16xf32>
    %146 = arith.maximumf %144, %145 : vector<8x16xf32>
    %c0_i32_41 = arith.constant 0 : i32
    %147 = vector.broadcast %c0_i32_41 : i32 to vector<1x16xi32>
    %148 = arith.cmpi eq, %34, %147 : vector<1x16xi32>
    %c1_i32_42 = arith.constant 1 : i32
    %149 = tpu.dynamic_rotate %146 by %c1_i32_42 dim 1 : vector<8x16xf32>, i32 -> vector<8x16xf32>
    %cst_43 = arith.constant 0.000000e+00 : f32
    %150 = vector.shape_cast %148 : vector<1x16xi1> to vector<1x16xi1>
    %151 = vector.broadcast %150 : vector<1x16xi1> to vector<8x16xi1>
    %152 = vector.broadcast %cst_43 : f32 to vector<8x16xf32>
    %153 = arith.select %151, %152, %149 : vector<8x16xi1>, vector<8x16xf32>
    %c15_i32_44 = arith.constant 15 : i32
    %154 = vector.broadcast %c15_i32_44 : i32 to vector<1x16xi32>
    %155 = arith.cmpi eq, %34, %154 : vector<1x16xi32>
    %c15_i32_45 = arith.constant 15 : i32
    %156 = tpu.dynamic_rotate %146 by %c15_i32_45 dim 1 : vector<8x16xf32>, i32 -> vector<8x16xf32>
    %cst_46 = arith.constant 0.000000e+00 : f32
    %157 = vector.shape_cast %155 : vector<1x16xi1> to vector<1x16xi1>
    %158 = vector.broadcast %157 : vector<1x16xi1> to vector<8x16xi1>
    %159 = vector.broadcast %cst_46 : f32 to vector<8x16xf32>
    %160 = arith.select %158, %159, %156 : vector<8x16xi1>, vector<8x16xf32>
    %cst_47 = arith.constant dense<0.000000e+00> : vector<8x16xf32>
    %161 = tpu.matmul %27, %153, %cst_47 {dimension_numbers = #tpu.dot_dimension_numbers<[1], [0], [0], [1], [0, 0, 1, 1], [], []>} : vector<8x8xf32>, vector<8x16xf32>, vector<8x16xf32> -> vector<8x16xf32>
    %cst_48 = arith.constant dense<0.000000e+00> : vector<8x16xf32>
    %162 = tpu.matmul %30, %146, %cst_48 {dimension_numbers = #tpu.dot_dimension_numbers<[1], [0], [0], [1], [0, 0, 1, 1], [], []>} : vector<8x8xf32>, vector<8x16xf32>, vector<8x16xf32> -> vector<8x16xf32>
    %163 = arith.addf %161, %162 : vector<8x16xf32>
    %cst_49 = arith.constant dense<0.000000e+00> : vector<8x16xf32>
    %164 = tpu.matmul %33, %160, %cst_49 {dimension_numbers = #tpu.dot_dimension_numbers<[1], [0], [0], [1], [0, 0, 1, 1], [], []>} : vector<8x8xf32>, vector<8x16xf32>, vector<8x16xf32> -> vector<8x16xf32>
    %165 = arith.addf %163, %164 : vector<8x16xf32>
    %166 = vector.broadcast %138 : vector<8x1xf32> to vector<8x16xf32>
    %167 = arith.mulf %113, %166 : vector<8x16xf32>
    %168 = vector.broadcast %140 : vector<8x1xf32> to vector<8x16xf32>
    %169 = arith.addf %167, %168 : vector<8x16xf32>
    %cst_50 = arith.constant 0.000000e+00 : f32
    %170 = vector.broadcast %cst_50 : f32 to vector<8x16xf32>
    %171 = arith.maximumf %169, %170 : vector<8x16xf32>
    %c0_i32_51 = arith.constant 0 : i32
    %172 = vector.broadcast %c0_i32_51 : i32 to vector<1x16xi32>
    %173 = arith.cmpi eq, %34, %172 : vector<1x16xi32>
    %c1_i32_52 = arith.constant 1 : i32
    %174 = tpu.dynamic_rotate %171 by %c1_i32_52 dim 1 : vector<8x16xf32>, i32 -> vector<8x16xf32>
    %cst_53 = arith.constant 0.000000e+00 : f32
    %175 = vector.shape_cast %173 : vector<1x16xi1> to vector<1x16xi1>
    %176 = vector.broadcast %175 : vector<1x16xi1> to vector<8x16xi1>
    %177 = vector.broadcast %cst_53 : f32 to vector<8x16xf32>
    %178 = arith.select %176, %177, %174 : vector<8x16xi1>, vector<8x16xf32>
    %c15_i32_54 = arith.constant 15 : i32
    %179 = vector.broadcast %c15_i32_54 : i32 to vector<1x16xi32>
    %180 = arith.cmpi eq, %34, %179 : vector<1x16xi32>
    %c15_i32_55 = arith.constant 15 : i32
    %181 = tpu.dynamic_rotate %171 by %c15_i32_55 dim 1 : vector<8x16xf32>, i32 -> vector<8x16xf32>
    %cst_56 = arith.constant 0.000000e+00 : f32
    %182 = vector.shape_cast %180 : vector<1x16xi1> to vector<1x16xi1>
    %183 = vector.broadcast %182 : vector<1x16xi1> to vector<8x16xi1>
    %184 = vector.broadcast %cst_56 : f32 to vector<8x16xf32>
    %185 = arith.select %183, %184, %181 : vector<8x16xi1>, vector<8x16xf32>
    %cst_57 = arith.constant dense<0.000000e+00> : vector<8x16xf32>
    %186 = tpu.matmul %27, %178, %cst_57 {dimension_numbers = #tpu.dot_dimension_numbers<[1], [0], [0], [1], [0, 0, 1, 1], [], []>} : vector<8x8xf32>, vector<8x16xf32>, vector<8x16xf32> -> vector<8x16xf32>
    %cst_58 = arith.constant dense<0.000000e+00> : vector<8x16xf32>
    %187 = tpu.matmul %30, %171, %cst_58 {dimension_numbers = #tpu.dot_dimension_numbers<[1], [0], [0], [1], [0, 0, 1, 1], [], []>} : vector<8x8xf32>, vector<8x16xf32>, vector<8x16xf32> -> vector<8x16xf32>
    %188 = arith.addf %186, %187 : vector<8x16xf32>
    %cst_59 = arith.constant dense<0.000000e+00> : vector<8x16xf32>
    %189 = tpu.matmul %33, %185, %cst_59 {dimension_numbers = #tpu.dot_dimension_numbers<[1], [0], [0], [1], [0, 0, 1, 1], [], []>} : vector<8x8xf32>, vector<8x16xf32>, vector<8x16xf32> -> vector<8x16xf32>
    %190 = arith.addf %188, %189 : vector<8x16xf32>
    %191 = arith.addf %165, %93 : vector<8x16xf32>
    %192 = arith.addf %190, %116 : vector<8x16xf32>
    %cst_60 = arith.constant dense<0.000000e+00> : vector<8xf32>
    %193 = vector.multi_reduction <add>, %191, %cst_60 [1] : vector<8x16xf32> to vector<8xf32>
    %194 = vector.shape_cast %193 : vector<8xf32> to vector<8x1xf32>
    %195 = arith.mulf %191, %191 : vector<8x16xf32>
    %cst_61 = arith.constant dense<0.000000e+00> : vector<8xf32>
    %196 = vector.multi_reduction <add>, %195, %cst_61 [1] : vector<8x16xf32> to vector<8xf32>
    %197 = vector.shape_cast %196 : vector<8xf32> to vector<8x1xf32>
    %cst_62 = arith.constant dense<0.000000e+00> : vector<8xf32>
    %198 = vector.multi_reduction <add>, %192, %cst_62 [1] : vector<8x16xf32> to vector<8xf32>
    %199 = vector.shape_cast %198 : vector<8xf32> to vector<8x1xf32>
    %200 = arith.addf %194, %199 : vector<8x1xf32>
    %201 = arith.mulf %192, %192 : vector<8x16xf32>
    %cst_63 = arith.constant dense<0.000000e+00> : vector<8xf32>
    %202 = vector.multi_reduction <add>, %201, %cst_63 [1] : vector<8x16xf32> to vector<8xf32>
    %203 = vector.shape_cast %202 : vector<8xf32> to vector<8x1xf32>
    %204 = arith.addf %197, %203 : vector<8x1xf32>
    %cst_64 = arith.constant 3.125000e-02 : f32
    %205 = vector.broadcast %cst_64 : f32 to vector<8x1xf32>
    %206 = arith.mulf %200, %205 : vector<8x1xf32>
    %cst_65 = arith.constant 3.125000e-02 : f32
    %207 = vector.broadcast %cst_65 : f32 to vector<8x1xf32>
    %208 = arith.mulf %204, %207 : vector<8x1xf32>
    %209 = arith.mulf %206, %206 : vector<8x1xf32>
    %210 = arith.subf %208, %209 : vector<8x1xf32>
    %cst_66 = arith.constant 9.99999974E-6 : f32
    %211 = vector.broadcast %cst_66 : f32 to vector<8x1xf32>
    %212 = arith.addf %210, %211 : vector<8x1xf32>
    %213 = math.rsqrt %212 : vector<8x1xf32>
    %214 = arith.mulf %213, %13 : vector<8x1xf32>
    %215 = arith.mulf %206, %214 : vector<8x1xf32>
    %216 = arith.subf %14, %215 : vector<8x1xf32>
    %217 = vector.broadcast %214 : vector<8x1xf32> to vector<8x16xf32>
    %218 = arith.mulf %191, %217 : vector<8x16xf32>
    %219 = vector.broadcast %216 : vector<8x1xf32> to vector<8x16xf32>
    %220 = arith.addf %218, %219 : vector<8x16xf32>
    %cst_67 = arith.constant 0.000000e+00 : f32
    %221 = vector.broadcast %cst_67 : f32 to vector<8x16xf32>
    %222 = arith.maximumf %220, %221 : vector<8x16xf32>
    %cst_68 = arith.constant dense<0xFF800000> : vector<8xf32>
    %223 = vector.multi_reduction <maximumf>, %222, %cst_68 [1] : vector<8x16xf32> to vector<8xf32>
    %224 = vector.shape_cast %223 : vector<8xf32> to vector<8x1xf32>
    %c0_69 = arith.constant 0 : index
    %c0_70 = arith.constant 0 : index
    %c0_71 = arith.constant 0 : index
    %225 = vector.load %arg5[%c0_69, %c0_70, %c0_71] : memref<2x8x1xf32, #tpu.memory_space<vmem>>, vector<1x8x1xf32>
    %226 = vector.shape_cast %225 : vector<1x8x1xf32> to vector<8x1xf32>
    %227 = vector.shape_cast %224 : vector<8x1xf32> to vector<1x8x1xf32>
    tpu.vector_store %arg5[%c0_69, %c0_70, %c0_71], %227 {strides = array<i32>} : memref<2x8x1xf32, #tpu.memory_space<vmem>>, vector<1x8x1xf32>,
    %228 = vector.broadcast %214 : vector<8x1xf32> to vector<8x16xf32>
    %229 = arith.mulf %192, %228 : vector<8x16xf32>
    %230 = vector.broadcast %216 : vector<8x1xf32> to vector<8x16xf32>
    %231 = arith.addf %229, %230 : vector<8x16xf32>
    %cst_72 = arith.constant 0.000000e+00 : f32
    %232 = vector.broadcast %cst_72 : f32 to vector<8x16xf32>
    %233 = arith.maximumf %231, %232 : vector<8x16xf32>
    %cst_73 = arith.constant dense<0xFF800000> : vector<8xf32>
    %234 = vector.multi_reduction <maximumf>, %233, %cst_73 [1] : vector<8x16xf32> to vector<8xf32>
    %235 = vector.shape_cast %234 : vector<8xf32> to vector<8x1xf32>
    %c1_74 = arith.constant 1 : index
    %c0_75 = arith.constant 0 : index
    %c0_76 = arith.constant 0 : index
    %236 = vector.load %arg5[%c1_74, %c0_75, %c0_76] : memref<2x8x1xf32, #tpu.memory_space<vmem>>, vector<1x8x1xf32>
    %237 = vector.shape_cast %236 : vector<1x8x1xf32> to vector<8x1xf32>
    %238 = vector.shape_cast %235 : vector<8x1xf32> to vector<1x8x1xf32>
    tpu.vector_store %arg5[%c1_74, %c0_75, %c0_76], %238 {strides = array<i32>} : memref<2x8x1xf32, #tpu.memory_space<vmem>>, vector<1x8x1xf32>,
    return
  }
}

</mosaic_0001>

<llo_original>
// kernel: tpu_custom_call.1
$region0: #{tpu_custom_call.1}
  #allocation0 [shape = 'u32[]', space=smem, size = 0x4, offset = 0x4, fixed_abs, tag = 'smem constant byte address 0x4 - core index']
  #allocation1 [shape = 'u32[144,128]{1,0:T(1,128)}', space=vmem, size = 0x12000, scoped, tag = 'internal scratch']
  %s0 = inlined_call_operand.vmem [shape: f32[2,4,16], index: 0, kind: input, shape index: {}]
  %s1 = inlined_call_operand.vmem [shape: f32[16,4], index: 1, kind: input, shape index: {}]
  %s2 = inlined_call_operand.vmem [shape: f32[8,8], index: 2, kind: input, shape index: {}]
  %s3 = inlined_call_operand.vmem [shape: f32[6,8], index: 3, kind: input, shape index: {}]
  %s4 = inlined_call_operand.vmem [shape: f32[8,7], index: 4, kind: input, shape index: {}]
  %s5 = inlined_call_operand.vmem [shape: f32[2,8,1], index: 5, kind: output, shape index: {}]
  %s6 = sld [smem:[#allocation0]]
  $region30: #{tpu_custom_call.1} parent=0
    _
  %s8 = ssub.s32 1, %s6
  %s9 = scalar_select 0, %s8, %s6
  // Predicated region
  $region2: #{tpu_custom_call.1} parent=0 // pred_check
    _
  $region3: #{tpu_custom_call.1} parent=0 // pred_check_branch
    %11 = sbr.rel (0) target = $region5
  $region4: #{tpu_custom_call.1} parent=0 // pred_region
    _
  $region5: #{tpu_custom_call.1} parent=0 // pred_fallthru
    _
  // Predicated region
  $region6: #{tpu_custom_call.1} parent=0 // pred_check
    _
  $region7: #{tpu_custom_call.1} parent=0 // pred_check_branch
    %13 = sbr.rel (0) target = $region9
  $region8: #{tpu_custom_call.1} parent=0 // pred_region
    _
  $region9: #{tpu_custom_call.1} parent=0 // pred_fallthru
    _
  // Predicated region
  $region10: #{tpu_custom_call.1} parent=0 // pred_check
    _
  $region11: #{tpu_custom_call.1} parent=0 // pred_check_branch
    %15 = sbr.rel (0) target = $region13
  $region12: #{tpu_custom_call.1} parent=0 // pred_region
    _
  $region13: #{tpu_custom_call.1} parent=0 // pred_fallthru
    _
  // Predicated region
  $region14: #{tpu_custom_call.1} parent=0 // pred_check
    _
  $region15: #{tpu_custom_call.1} parent=0 // pred_check_branch
    %17 = sbr.rel (0) target = $region17
  $region16: #{tpu_custom_call.1} parent=0 // pred_region
    _
  $region17: #{tpu_custom_call.1} parent=0 // pred_fallthru
    _
  // Predicated region
  $region18: #{tpu_custom_call.1} parent=0 // pred_check
    _
  $region19: #{tpu_custom_call.1} parent=0 // pred_check_branch
    %19 = sbr.rel (0) target = $region21
  $region20: #{tpu_custom_call.1} parent=0 // pred_region
    _
  $region21: #{tpu_custom_call.1} parent=0 // pred_fallthru
    _
  %v20 = vld [vmem:[%s1] sm:$0xff]
  %v21 = vld [vmem:[%s1 + $0x8] sm:$0xff]
  %v22 = vld [vmem:[%s2] sm:$0xff]
  %v23 = vld [vmem:[%s3] sm:$0x3f]
  %v24 = vld [vmem:[%s4] sm:$0xff]
  %v25 = vlaneseq
  %v26 = vshrl.u32 %v25, 7
  %v27 = vsub.s32 0, %v26
  %v28 = vrot.slane %v23, %v27
  %v29 = vmul.f32 %v20, %v28
  %v30 = vlaneseq
  %v31 = vshrl.u32 %v30, 7
  %v32 = vsub.s32 2, %v31
  %v33 = vrot.slane %v23, %v32
  %v34 = vmul.f32 %v20, %v33
  %v35 = vlaneseq
  %v36 = vshrl.u32 %v35, 7
  %v37 = vsub.s32 1, %v36
  %v38 = vrot.slane %v23, %v37
  %v39 = vmul.f32 %v20, %v38
  %v40 = vlaneseq
  %v41 = vshrl.u32 %v40, 7
  %v42 = vsub.s32 3, %v41
  %v43 = vrot.slane %v23, %v42
  %v44 = vmul.f32 %v22, %v43
  %v45 = vlaneseq
  %v46 = vshrl.u32 %v45, 7
  %v47 = vsub.s32 4, %v46
  %v48 = vrot.slane %v23, %v47
  %v49 = vmul.f32 %v22, %v48
  %v50 = vlaneseq
  %v51 = vshrl.u32 %v50, 7
  %v52 = vsub.s32 5, %v51
  %v53 = vrot.slane %v23, %v52
  %v54 = vmul.f32 %v22, %v53
  %v55 = vlaneseq
  %v56 = vand.u32 %v55, 127
  %v57 = vld [vmem:[%s0] sm:$0xf]
  %s58 = scalar_lea.vmem %s0, 4
  %v59 = vld [vmem:[%s58] sm:$0xf]
  %vm60 = vcmask 125952
  %v61 = vsel %vm60, %v57, 0.0
  %62 = vadd.xlane.f32.xlu0 %v61
  %v63 = vpop.xlane.xlu0 %62
  %v64 = vmul.f32 %v57, %v57
  %v65 = vsel %vm60, %v64, 0.0
  %66 = vadd.xlane.f32.xlu0 %v65
  %v67 = vpop.xlane.xlu0 %66
  %v68 = vsel %vm60, %v59, 0.0
  %69 = vadd.xlane.f32.xlu0 %v68
  %v70 = vpop.xlane.xlu0 %69
  %v71 = vadd.f32 %v63, %v70
  %v72 = vmul.f32 %v59, %v59
  %v73 = vsel %vm60, %v72, 0.0
  %74 = vadd.xlane.f32.xlu0 %v73
  %v75 = vpop.xlane.xlu0 %74
  %v76 = vadd.f32 %v67, %v75
  %v77 = vmul.f32 %v71, 0.03125
  %v78 = vmul.f32 %v76, 0.03125
  %v79 = vmul.f32 %v77, %v77
  %v80 = vsub.f32 %v78, %v79
  %v81 = vadd.f32 %v80, 1e-05
  %v82 = vrsqrt.pop %v81
  %v83 = vmul.f32 %v82, %v24
  %v84 = vmul.f32 %v77, %v83
  %86 = vrot.lane.b32.xlu0 %v84, 1
  %v87 = vpop.permute.xlu0 %86
  %v89 = vsub.f32 %v24, %v87
  %91 = vset.pattern.permute.xlu0 1
  %92 = vperm.xlu0 %91, %v83
  %v93 = vpop.permute.xlu0 %92
  %v95 = vmul.f32 %v57, %v93
  %97 = vset.pattern.permute.xlu0 2
  %98 = vperm.xlu0 %97, %v89
  %v99 = vpop.permute.xlu0 %98
  %v101 = vadd.f32 %v95, %v99
  %v102 = vmul.f32 %v59, %v93
  %v103 = vadd.f32 %v102, %v99
  %vm104 = vcmp.eq.s32.totalorder %v56, 0
  %vm105 = vcmask 1047680
  %106 = vrot.lane.b32.xlu0 %v101, 16
  %v107 = vpop.permute.xlu0 %106
  %v108 = vsel %vm105, %v107, %v101
  %109 = vrot.lane.b32.xlu0 %v108, 16
  %v110 = vpop.permute.xlu0 %109
  %v111 = vsel %vm105, %v110, %v101
  %v112 = vsel %vm104, 1, 0
  %vm113 = vcmp.eq.s32.totalorder %v112, 1
  %115 = vrot.lane.b32.xlu0 %v111, 113
  %v116 = vpop.permute.xlu0 %115
  %v118 = vsel %vm113, 0.0, %v116
  %vm119 = vcmp.eq.s32.totalorder %v56, 15
  %v120 = vsel %vm119, 1, 0
  %vm121 = vcmp.eq.s32.totalorder %v120, 1
  %122 = vrot.lane.b32.xlu0 %v111, 127
  %v123 = vpop.permute.xlu0 %122
  %v125 = vsel %vm121, 0.0, %v123
  %vm126 = vcmask 31744
  %v128 = vsel %vm126, %v39, 0
  %v131 = vsel %vm126, %v21, 0
  %vm133 = vcmask 1043456
  %v135 = vsel %vm133, %v101, 0
  %137 = vmatprep.subr.mxu0 0.0
  %138 = vmatpush1.msra.mxu0 %v135
  %139 = vmatprep.subr.mxu0 0.0
  %140 = vmatpush1.msra.mxu0 0.0
  %141 = vmatprep.subr.mxu0 0.0
  %142 = vmatpush1.msra.mxu0 0.0
  %143 = vmatprep.subr.mxu0 0.0
  %144 = vmatpush1.msra.mxu0 0.0
  %145 = vmatprep.subr.mxu0 0.0
  %146 = vmatpush1.msra.mxu0 0.0
  %147 = vmatprep.subr.mxu0 0.0
  %148 = vmatpush1.msra.mxu0 0.0
  %149 = vmatprep.subr.mxu0 0.0
  %150 = vmatpush1.msra.mxu0 0.0
  %151 = vmatprep.subr.mxu0 0.0
  %152 = vmatpush1.msra.mxu0 0.0
  %153 = vmatprep.subr.mxu0 0.0
  %154 = vmatpush1.msra.mxu0 0.0
  %155 = vmatprep.subr.mxu0 0.0
  %156 = vmatpush1.msra.mxu0 0.0
  %157 = vmatprep.subr.mxu0 0.0
  %158 = vmatpush1.msra.mxu0 0.0
  %159 = vmatprep.subr.mxu0 0.0
  %160 = vmatpush1.msra.mxu0 0.0
  %161 = vmatprep.subr.mxu0 0.0
  %162 = vmatpush1.msra.mxu0 0.0
  %163 = vmatprep.subr.mxu0 0.0
  %164 = vmatpush1.msra.mxu0 0.0
  %165 = vmatprep.subr.mxu0 0.0
  %166 = vmatpush1.msra.mxu0 0.0
  %167 = vmatprep.subr.mxu0 0.0
  %168 = vmatpush1.msra.mxu0 0.0
  %169 = vmatprep.subr.mxu0 0.0
  %170 = vmatpush1.msra.mxu0 0.0
  %171 = vmatprep.subr.mxu0 0.0
  %172 = vmatpush1.msra.mxu0 0.0
  %173 = vmatprep.subr.mxu0 0.0
  %174 = vmatpush1.msra.mxu0 0.0
  %175 = vmatprep.subr.mxu0 0.0
  %176 = vmatpush1.msra.mxu0 0.0
  %177 = vmatprep.subr.mxu0 0.0
  %178 = vmatpush1.msra.mxu0 0.0
  %179 = vmatprep.subr.mxu0 0.0
  %180 = vmatpush1.msra.mxu0 0.0
  %181 = vmatprep.subr.mxu0 0.0
  %182 = vmatpush1.msra.mxu0 0.0
  %183 = vmatprep.subr.mxu0 0.0
  %184 = vmatpush1.msra.mxu0 0.0
  %185 = vmatprep.subr.mxu0 0.0
  %186 = vmatpush1.msra.mxu0 0.0
  %187 = vmatprep.subr.mxu0 0.0
  %188 = vmatpush1.msra.mxu0 0.0
  %189 = vmatprep.subr.mxu0 0.0
  %190 = vmatpush1.msra.mxu0 0.0
  %191 = vmatprep.subr.mxu0 0.0
  %192 = vmatpush1.msra.mxu0 0.0
  %193 = vmatprep.subr.mxu0 0.0
  %194 = vmatpush1.msra.mxu0 0.0
  %195 = vmatprep.subr.mxu0 0.0
  %196 = vmatpush1.msra.mxu0 0.0
  %197 = vmatprep.subr.mxu0 0.0
  %198 = vmatpush1.msra.mxu0 0.0
  %199 = vmatprep.subr.mxu0 0.0
  %200 = vmatpush1.msra.mxu0 0.0
  %201 = vmatprep.mubr.f32.mxu0 0.0
  %202 = vmatmul.mubr.f32.gmra.mrb[0].mxu0 %v128
  %v203 = vpop.f32.mrb[0].mxu0
  %v204 = vadd.f32 0.0, %v203
  %v205 = vpop.f32.mrb[0].mxu0
  %206 = vmatprep.mubr.f32.mxu0 0.0
  %207 = vmatmul.mubr.f32.gmra.mrb[0].mxu0 %v131
  %v208 = vpop.f32.mrb[0].mxu0
  %v209 = vadd.f32 0.0, %v208
  %v210 = vpop.f32.mrb[0].mxu0
  %211 = vdwg.mxu0
  %v213 = vsel %vm126, %v29, 0
  %v216 = vsel %vm133, %v118, 0
  %218 = vmatprep.subr.mxu0 0.0
  %219 = vmatpush1.msra.mxu0 %v216
  %220 = vmatprep.subr.mxu0 0.0
  %221 = vmatpush1.msra.mxu0 0.0
  %222 = vmatprep.subr.mxu0 0.0
  %223 = vmatpush1.msra.mxu0 0.0
  %224 = vmatprep.subr.mxu0 0.0
  %225 = vmatpush1.msra.mxu0 0.0
  %226 = vmatprep.subr.mxu0 0.0
  %227 = vmatpush1.msra.mxu0 0.0
  %228 = vmatprep.subr.mxu0 0.0
  %229 = vmatpush1.msra.mxu0 0.0
  %230 = vmatprep.subr.mxu0 0.0
  %231 = vmatpush1.msra.mxu0 0.0
  %232 = vmatprep.subr.mxu0 0.0
  %233 = vmatpush1.msra.mxu0 0.0
  %234 = vmatprep.subr.mxu0 0.0
  %235 = vmatpush1.msra.mxu0 0.0
  %236 = vmatprep.subr.mxu0 0.0
  %237 = vmatpush1.msra.mxu0 0.0
  %238 = vmatprep.subr.mxu0 0.0
  %239 = vmatpush1.msra.mxu0 0.0
  %240 = vmatprep.subr.mxu0 0.0
  %241 = vmatpush1.msra.mxu0 0.0
  %242 = vmatprep.subr.mxu0 0.0
  %243 = vmatpush1.msra.mxu0 0.0
  %244 = vmatprep.subr.mxu0 0.0
  %245 = vmatpush1.msra.mxu0 0.0
  %246 = vmatprep.subr.mxu0 0.0
  %247 = vmatpush1.msra.mxu0 0.0
  %248 = vmatprep.subr.mxu0 0.0
  %249 = vmatpush1.msra.mxu0 0.0
  %250 = vmatprep.subr.mxu0 0.0
  %251 = vmatpush1.msra.mxu0 0.0
  %252 = vmatprep.subr.mxu0 0.0
  %253 = vmatpush1.msra.mxu0 0.0
  %254 = vmatprep.subr.mxu0 0.0
  %255 = vmatpush1.msra.mxu0 0.0
  %256 = vmatprep.subr.mxu0 0.0
  %257 = vmatpush1.msra.mxu0 0.0
  %258 = vmatprep.subr.mxu0 0.0
  %259 = vmatpush1.msra.mxu0 0.0
  %260 = vmatprep.subr.mxu0 0.0
  %261 = vmatpush1.msra.mxu0 0.0
  %262 = vmatprep.subr.mxu0 0.0
  %263 = vmatpush1.msra.mxu0 0.0
  %264 = vmatprep.subr.mxu0 0.0
  %265 = vmatpush1.msra.mxu0 0.0
  %266 = vmatprep.subr.mxu0 0.0
  %267 = vmatpush1.msra.mxu0 0.0
  %268 = vmatprep.subr.mxu0 0.0
  %269 = vmatpush1.msra.mxu0 0.0
  %270 = vmatprep.subr.mxu0 0.0
  %271 = vmatpush1.msra.mxu0 0.0
  %272 = vmatprep.subr.mxu0 0.0
  %273 = vmatpush1.msra.mxu0 0.0
  %274 = vmatprep.subr.mxu0 0.0
  %275 = vmatpush1.msra.mxu0 0.0
  %276 = vmatprep.subr.mxu0 0.0
  %277 = vmatpush1.msra.mxu0 0.0
  %278 = vmatprep.subr.mxu0 0.0
  %279 = vmatpush1.msra.mxu0 0.0
  %280 = vmatprep.subr.mxu0 0.0
  %281 = vmatpush1.msra.mxu0 0.0
  %282 = vmatprep.mubr.f32.mxu0 0.0
  %283 = vmatmul.mubr.f32.gmra.mrb[0].mxu0 %v213
  %v284 = vpop.f32.mrb[0].mxu0
  %v285 = vadd.f32 %v204, %v284
  %v286 = vpop.f32.mrb[0].mxu0
  %287 = vdwg.mxu0
  %v289 = vsel %vm126, %v34, 0
  %v292 = vsel %vm133, %v125, 0
  %294 = vmatprep.subr.mxu0 0.0
  %295 = vmatpush1.msra.mxu0 %v292
  %296 = vmatprep.subr.mxu0 0.0
  %297 = vmatpush1.msra.mxu0 0.0
  %298 = vmatprep.subr.mxu0 0.0
  %299 = vmatpush1.msra.mxu0 0.0
  %300 = vmatprep.subr.mxu0 0.0
  %301 = vmatpush1.msra.mxu0 0.0
  %302 = vmatprep.subr.mxu0 0.0
  %303 = vmatpush1.msra.mxu0 0.0
  %304 = vmatprep.subr.mxu0 0.0
  %305 = vmatpush1.msra.mxu0 0.0
  %306 = vmatprep.subr.mxu0 0.0
  %307 = vmatpush1.msra.mxu0 0.0
  %308 = vmatprep.subr.mxu0 0.0
  %309 = vmatpush1.msra.mxu0 0.0
  %310 = vmatprep.subr.mxu0 0.0
  %311 = vmatpush1.msra.mxu0 0.0
  %312 = vmatprep.subr.mxu0 0.0
  %313 = vmatpush1.msra.mxu0 0.0
  %314 = vmatprep.subr.mxu0 0.0
  %315 = vmatpush1.msra.mxu0 0.0
  %316 = vmatprep.subr.mxu0 0.0
  %317 = vmatpush1.msra.mxu0 0.0
  %318 = vmatprep.subr.mxu0 0.0
  %319 = vmatpush1.msra.mxu0 0.0
  %320 = vmatprep.subr.mxu0 0.0
  %321 = vmatpush1.msra.mxu0 0.0
  %322 = vmatprep.subr.mxu0 0.0
  %323 = vmatpush1.msra.mxu0 0.0
  %324 = vmatprep.subr.mxu0 0.0
  %325 = vmatpush1.msra.mxu0 0.0
  %326 = vmatprep.subr.mxu0 0.0
  %327 = vmatpush1.msra.mxu0 0.0
  %328 = vmatprep.subr.mxu0 0.0
  %329 = vmatpush1.msra.mxu0 0.0
  %330 = vmatprep.subr.mxu0 0.0
  %331 = vmatpush1.msra.mxu0 0.0
  %332 = vmatprep.subr.mxu0 0.0
  %333 = vmatpush1.msra.mxu0 0.0
  %334 = vmatprep.subr.mxu0 0.0
  %335 = vmatpush1.msra.mxu0 0.0
  %336 = vmatprep.subr.mxu0 0.0
  %337 = vmatpush1.msra.mxu0 0.0
  %338 = vmatprep.subr.mxu0 0.0
  %339 = vmatpush1.msra.mxu0 0.0
  %340 = vmatprep.subr.mxu0 0.0
  %341 = vmatpush1.msra.mxu0 0.0
  %342 = vmatprep.subr.mxu0 0.0
  %343 = vmatpush1.msra.mxu0 0.0
  %344 = vmatprep.subr.mxu0 0.0
  %345 = vmatpush1.msra.mxu0 0.0
  %346 = vmatprep.subr.mxu0 0.0
  %347 = vmatpush1.msra.mxu0 0.0
  %348 = vmatprep.subr.mxu0 0.0
  %349 = vmatpush1.msra.mxu0 0.0
  %350 = vmatprep.subr.mxu0 0.0
  %351 = vmatpush1.msra.mxu0 0.0
  %352 = vmatprep.subr.mxu0 0.0
  %353 = vmatpush1.msra.mxu0 0.0
  %354 = vmatprep.subr.mxu0 0.0
  %355 = vmatpush1.msra.mxu0 0.0
  %356 = vmatprep.subr.mxu0 0.0
  %357 = vmatpush1.msra.mxu0 0.0
  %358 = vmatprep.mubr.f32.mxu0 0.0
  %359 = vmatmul.mubr.f32.gmra.mrb[0].mxu0 %v289
  %v360 = vpop.f32.mrb[0].mxu0
  %v361 = vadd.f32 0.0, %v360
  %v362 = vpop.f32.mrb[0].mxu0
  %363 = vdwg.mxu0
  %v364 = vadd.f32 %v285, %v361
  %366 = vset.pattern.permute.xlu0 0
  %367 = vperm.xlu0 %366, %v24
  %v368 = vpop.permute.xlu0 %367
  %v370 = vadd.f32 %v209, %v368
  %371 = vrot.lane.b32.xlu0 %v103, 16
  %v372 = vpop.permute.xlu0 %371
  %v373 = vsel %vm105, %v372, %v103
  %374 = vrot.lane.b32.xlu0 %v373, 16
  %v375 = vpop.permute.xlu0 %374
  %v376 = vsel %vm105, %v375, %v103
  %378 = vrot.lane.b32.xlu0 %v376, 113
  %v379 = vpop.permute.xlu0 %378
  %v381 = vsel %vm113, 0.0, %v379
  %382 = vrot.lane.b32.xlu0 %v376, 127
  %v383 = vpop.permute.xlu0 %382
  %v385 = vsel %vm121, 0.0, %v383
  %v387 = vsel %vm133, %v103, 0
  %389 = vmatprep.subr.mxu0 0.0
  %390 = vmatpush1.msra.mxu0 %v387
  %391 = vmatprep.subr.mxu0 0.0
  %392 = vmatpush1.msra.mxu0 0.0
  %393 = vmatprep.subr.mxu0 0.0
  %394 = vmatpush1.msra.mxu0 0.0
  %395 = vmatprep.subr.mxu0 0.0
  %396 = vmatpush1.msra.mxu0 0.0
  %397 = vmatprep.subr.mxu0 0.0
  %398 = vmatpush1.msra.mxu0 0.0
  %399 = vmatprep.subr.mxu0 0.0
  %400 = vmatpush1.msra.mxu0 0.0
  %401 = vmatprep.subr.mxu0 0.0
  %402 = vmatpush1.msra.mxu0 0.0
  %403 = vmatprep.subr.mxu0 0.0
  %404 = vmatpush1.msra.mxu0 0.0
  %405 = vmatprep.subr.mxu0 0.0
  %406 = vmatpush1.msra.mxu0 0.0
  %407 = vmatprep.subr.mxu0 0.0
  %408 = vmatpush1.msra.mxu0 0.0
  %409 = vmatprep.subr.mxu0 0.0
  %410 = vmatpush1.msra.mxu0 0.0
  %411 = vmatprep.subr.mxu0 0.0
  %412 = vmatpush1.msra.mxu0 0.0
  %413 = vmatprep.subr.mxu0 0.0
  %414 = vmatpush1.msra.mxu0 0.0
  %415 = vmatprep.subr.mxu0 0.0
  %416 = vmatpush1.msra.mxu0 0.0
  %417 = vmatprep.subr.mxu0 0.0
  %418 = vmatpush1.msra.mxu0 0.0
  %419 = vmatprep.subr.mxu0 0.0
  %420 = vmatpush1.msra.mxu0 0.0
  %421 = vmatprep.subr.mxu0 0.0
  %422 = vmatpush1.msra.mxu0 0.0
  %423 = vmatprep.subr.mxu0 0.0
  %424 = vmatpush1.msra.mxu0 0.0
  %425 = vmatprep.subr.mxu0 0.0
  %426 = vmatpush1.msra.mxu0 0.0
  %427 = vmatprep.subr.mxu0 0.0
  %428 = vmatpush1.msra.mxu0 0.0
  %429 = vmatprep.subr.mxu0 0.0
  %430 = vmatpush1.msra.mxu0 0.0
  %431 = vmatprep.subr.mxu0 0.0
  %432 = vmatpush1.msra.mxu0 0.0
  %433 = vmatprep.subr.mxu0 0.0
  %434 = vmatpush1.msra.mxu0 0.0
  %435 = vmatprep.subr.mxu0 0.0
  %436 = vmatpush1.msra.mxu0 0.0
  %437 = vmatprep.subr.mxu0 0.0
  %438 = vmatpush1.msra.mxu0 0.0
  %439 = vmatprep.subr.mxu0 0.0
  %440 = vmatpush1.msra.mxu0 0.0
  %441 = vmatprep.subr.mxu0 0.0
  %442 = vmatpush1.msra.mxu0 0.0
  %443 = vmatprep.subr.mxu0 0.0
  %444 = vmatpush1.msra.mxu0 0.0
  %445 = vmatprep.subr.mxu0 0.0
  %446 = vmatpush1.msra.mxu0 0.0
  %447 = vmatprep.subr.mxu0 0.0
  %448 = vmatpush1.msra.mxu0 0.0
  %449 = vmatprep.subr.mxu0 0.0
  %450 = vmatpush1.msra.mxu0 0.0
  %451 = vmatprep.subr.mxu0 0.0
  %452 = vmatpush1.msra.mxu0 0.0
  %453 = vmatprep.mubr.f32.mxu0 0.0
  %454 = vmatmul.mubr.f32.gmra.mrb[0].mxu0 %v128
  %v455 = vpop.f32.mrb[0].mxu0
  %v456 = vadd.f32 0.0, %v455
  %v457 = vpop.f32.mrb[0].mxu0
  %458 = vmatprep.mubr.f32.mxu0 0.0
  %459 = vmatmul.mubr.f32.gmra.mrb[0].mxu0 %v131
  %v460 = vpop.f32.mrb[0].mxu0
  %v461 = vadd.f32 0.0, %v460
  %v462 = vpop.f32.mrb[0].mxu0
  %463 = vdwg.mxu0
  %v465 = vsel %vm133, %v381, 0
  %467 = vmatprep.subr.mxu0 0.0
  %468 = vmatpush1.msra.mxu0 %v465
  %469 = vmatprep.subr.mxu0 0.0
  %470 = vmatpush1.msra.mxu0 0.0
  %471 = vmatprep.subr.mxu0 0.0
  %472 = vmatpush1.msra.mxu0 0.0
  %473 = vmatprep.subr.mxu0 0.0
  %474 = vmatpush1.msra.mxu0 0.0
  %475 = vmatprep.subr.mxu0 0.0
  %476 = vmatpush1.msra.mxu0 0.0
  %477 = vmatprep.subr.mxu0 0.0
  %478 = vmatpush1.msra.mxu0 0.0
  %479 = vmatprep.subr.mxu0 0.0
  %480 = vmatpush1.msra.mxu0 0.0
  %481 = vmatprep.subr.mxu0 0.0
  %482 = vmatpush1.msra.mxu0 0.0
  %483 = vmatprep.subr.mxu0 0.0
  %484 = vmatpush1.msra.mxu0 0.0
  %485 = vmatprep.subr.mxu0 0.0
  %486 = vmatpush1.msra.mxu0 0.0
  %487 = vmatprep.subr.mxu0 0.0
  %488 = vmatpush1.msra.mxu0 0.0
  %489 = vmatprep.subr.mxu0 0.0
  %490 = vmatpush1.msra.mxu0 0.0
  %491 = vmatprep.subr.mxu0 0.0
  %492 = vmatpush1.msra.mxu0 0.0
  %493 = vmatprep.subr.mxu0 0.0
  %494 = vmatpush1.msra.mxu0 0.0
  %495 = vmatprep.subr.mxu0 0.0
  %496 = vmatpush1.msra.mxu0 0.0
  %497 = vmatprep.subr.mxu0 0.0
  %498 = vmatpush1.msra.mxu0 0.0
  %499 = vmatprep.subr.mxu0 0.0
  %500 = vmatpush1.msra.mxu0 0.0
  %501 = vmatprep.subr.mxu0 0.0
  %502 = vmatpush1.msra.mxu0 0.0
  %503 = vmatprep.subr.mxu0 0.0
  %504 = vmatpush1.msra.mxu0 0.0
  %505 = vmatprep.subr.mxu0 0.0
  %506 = vmatpush1.msra.mxu0 0.0
  %507 = vmatprep.subr.mxu0 0.0
  %508 = vmatpush1.msra.mxu0 0.0
  %509 = vmatprep.subr.mxu0 0.0
  %510 = vmatpush1.msra.mxu0 0.0
  %511 = vmatprep.subr.mxu0 0.0
  %512 = vmatpush1.msra.mxu0 0.0
  %513 = vmatprep.subr.mxu0 0.0
  %514 = vmatpush1.msra.mxu0 0.0
  %515 = vmatprep.subr.mxu0 0.0
  %516 = vmatpush1.msra.mxu0 0.0
  %517 = vmatprep.subr.mxu0 0.0
  %518 = vmatpush1.msra.mxu0 0.0
  %519 = vmatprep.subr.mxu0 0.0
  %520 = vmatpush1.msra.mxu0 0.0
  %521 = vmatprep.subr.mxu0 0.0
  %522 = vmatpush1.msra.mxu0 0.0
  %523 = vmatprep.subr.mxu0 0.0
  %524 = vmatpush1.msra.mxu0 0.0
  %525 = vmatprep.subr.mxu0 0.0
  %526 = vmatpush1.msra.mxu0 0.0
  %527 = vmatprep.subr.mxu0 0.0
  %528 = vmatpush1.msra.mxu0 0.0
  %529 = vmatprep.subr.mxu0 0.0
  %530 = vmatpush1.msra.mxu0 0.0
  %531 = vmatprep.mubr.f32.mxu0 0.0
  %532 = vmatmul.mubr.f32.gmra.mrb[0].mxu0 %v213
  %v533 = vpop.f32.mrb[0].mxu0
  %v534 = vadd.f32 %v456, %v533
  %v535 = vpop.f32.mrb[0].mxu0
  %536 = vdwg.mxu0
  %v538 = vsel %vm133, %v385, 0
  %540 = vmatprep.subr.mxu0 0.0
  %541 = vmatpush1.msra.mxu0 %v538
  %542 = vmatprep.subr.mxu0 0.0
  %543 = vmatpush1.msra.mxu0 0.0
  %544 = vmatprep.subr.mxu0 0.0
  %545 = vmatpush1.msra.mxu0 0.0
  %546 = vmatprep.subr.mxu0 0.0
  %547 = vmatpush1.msra.mxu0 0.0
  %548 = vmatprep.subr.mxu0 0.0
  %549 = vmatpush1.msra.mxu0 0.0
  %550 = vmatprep.subr.mxu0 0.0
  %551 = vmatpush1.msra.mxu0 0.0
  %552 = vmatprep.subr.mxu0 0.0
  %553 = vmatpush1.msra.mxu0 0.0
  %554 = vmatprep.subr.mxu0 0.0
  %555 = vmatpush1.msra.mxu0 0.0
  %556 = vmatprep.subr.mxu0 0.0
  %557 = vmatpush1.msra.mxu0 0.0
  %558 = vmatprep.subr.mxu0 0.0
  %559 = vmatpush1.msra.mxu0 0.0
  %560 = vmatprep.subr.mxu0 0.0
  %561 = vmatpush1.msra.mxu0 0.0
  %562 = vmatprep.subr.mxu0 0.0
  %563 = vmatpush1.msra.mxu0 0.0
  %564 = vmatprep.subr.mxu0 0.0
  %565 = vmatpush1.msra.mxu0 0.0
  %566 = vmatprep.subr.mxu0 0.0
  %567 = vmatpush1.msra.mxu0 0.0
  %568 = vmatprep.subr.mxu0 0.0
  %569 = vmatpush1.msra.mxu0 0.0
  %570 = vmatprep.subr.mxu0 0.0
  %571 = vmatpush1.msra.mxu0 0.0
  %572 = vmatprep.subr.mxu0 0.0
  %573 = vmatpush1.msra.mxu0 0.0
  %574 = vmatprep.subr.mxu0 0.0
  %575 = vmatpush1.msra.mxu0 0.0
  %576 = vmatprep.subr.mxu0 0.0
  %577 = vmatpush1.msra.mxu0 0.0
  %578 = vmatprep.subr.mxu0 0.0
  %579 = vmatpush1.msra.mxu0 0.0
  %580 = vmatprep.subr.mxu0 0.0
  %581 = vmatpush1.msra.mxu0 0.0
  %582 = vmatprep.subr.mxu0 0.0
  %583 = vmatpush1.msra.mxu0 0.0
  %584 = vmatprep.subr.mxu0 0.0
  %585 = vmatpush1.msra.mxu0 0.0
  %586 = vmatprep.subr.mxu0 0.0
  %587 = vmatpush1.msra.mxu0 0.0
  %588 = vmatprep.subr.mxu0 0.0
  %589 = vmatpush1.msra.mxu0 0.0
  %590 = vmatprep.subr.mxu0 0.0
  %591 = vmatpush1.msra.mxu0 0.0
  %592 = vmatprep.subr.mxu0 0.0
  %593 = vmatpush1.msra.mxu0 0.0
  %594 = vmatprep.subr.mxu0 0.0
  %595 = vmatpush1.msra.mxu0 0.0
  %596 = vmatprep.subr.mxu0 0.0
  %597 = vmatpush1.msra.mxu0 0.0
  %598 = vmatprep.subr.mxu0 0.0
  %599 = vmatpush1.msra.mxu0 0.0
  %600 = vmatprep.subr.mxu0 0.0
  %601 = vmatpush1.msra.mxu0 0.0
  %602 = vmatprep.subr.mxu0 0.0
  %603 = vmatpush1.msra.mxu0 0.0
  %604 = vmatprep.mubr.f32.mxu0 0.0
  %605 = vmatmul.mubr.f32.gmra.mrb[0].mxu0 %v289
  %v606 = vpop.f32.mrb[0].mxu0
  %v607 = vadd.f32 0.0, %v606
  %v608 = vpop.f32.mrb[0].mxu0
  %609 = vdwg.mxu0
  %v610 = vadd.f32 %v534, %v607
  %v611 = vadd.f32 %v461, %v368
  %vm612 = vcmask 130048
  %v613 = vsel %vm612, %v364, 0.0
  %614 = vadd.xlane.f32.xlu0 %v613
  %v615 = vpop.xlane.xlu0 %614
  %v616 = vmul.f32 %v364, %v364
  %v617 = vsel %vm612, %v616, 0.0
  %618 = vadd.xlane.f32.xlu0 %v617
  %v619 = vpop.xlane.xlu0 %618
  %v620 = vsel %vm612, %v610, 0.0
  %621 = vadd.xlane.f32.xlu0 %v620
  %v622 = vpop.xlane.xlu0 %621
  %v623 = vadd.f32 %v615, %v622
  %v624 = vmul.f32 %v610, %v610
  %v625 = vsel %vm612, %v624, 0.0
  %626 = vadd.xlane.f32.xlu0 %v625
  %v627 = vpop.xlane.xlu0 %626
  %v628 = vadd.f32 %v619, %v627
  %v629 = vmul.f32 %v623, 0.03125
  %v630 = vmul.f32 %v628, 0.03125
  %v631 = vmul.f32 %v629, %v629
  %v632 = vsub.f32 %v630, %v631
  %v633 = vadd.f32 %v632, 1e-05
  %v634 = vrsqrt.pop %v633
  %v635 = vmul.f32 %v634, %v24
  %v636 = vmul.f32 %v629, %v635
  %638 = vrot.lane.b32.xlu0 %v636, 1
  %v639 = vpop.permute.xlu0 %638
  %v641 = vsub.f32 %v24, %v639
  %643 = vset.pattern.permute.xlu0 3
  %644 = vperm.xlu0 %643, %v635
  %v645 = vpop.permute.xlu0 %644
  %v647 = vmul.f32 %v364, %v645
  %649 = vset.pattern.permute.xlu0 4
  %650 = vperm.xlu0 %649, %v641
  %v651 = vpop.permute.xlu0 %650
  %v653 = vadd.f32 %v647, %v651
  %v654 = vmax.f32 %v653, 0.0
  %655 = vrot.lane.b32.xlu0 %v654, 16
  %v656 = vpop.permute.xlu0 %655
  %v657 = vsel %vm105, %v656, %v654
  %658 = vrot.lane.b32.xlu0 %v657, 16
  %v659 = vpop.permute.xlu0 %658
  %v660 = vsel %vm105, %v659, %v654
  %662 = vrot.lane.b32.xlu0 %v660, 113
  %v663 = vpop.permute.xlu0 %662
  %v665 = vsel %vm113, 0.0, %v663
  %666 = vrot.lane.b32.xlu0 %v660, 127
  %v667 = vpop.permute.xlu0 %666
  %v669 = vsel %vm121, 0.0, %v667
  %vm670 = vcmask 64512
  %v672 = vsel %vm670, %v49, 0
  %674 = vmatprep.subr.mxu0 0.0
  %675 = vmatpush1.msra.mxu0 %v654
  %676 = vmatprep.subr.mxu0 0.0
  %677 = vmatpush1.msra.mxu0 0.0
  %678 = vmatprep.subr.mxu0 0.0
  %679 = vmatpush1.msra.mxu0 0.0
  %680 = vmatprep.subr.mxu0 0.0
  %681 = vmatpush1.msra.mxu0 0.0
  %682 = vmatprep.subr.mxu0 0.0
  %683 = vmatpush1.msra.mxu0 0.0
  %684 = vmatprep.subr.mxu0 0.0
  %685 = vmatpush1.msra.mxu0 0.0
  %686 = vmatprep.subr.mxu0 0.0
  %687 = vmatpush1.msra.mxu0 0.0
  %688 = vmatprep.subr.mxu0 0.0
  %689 = vmatpush1.msra.mxu0 0.0
  %690 = vmatprep.subr.mxu0 0.0
  %691 = vmatpush1.msra.mxu0 0.0
  %692 = vmatprep.subr.mxu0 0.0
  %693 = vmatpush1.msra.mxu0 0.0
  %694 = vmatprep.subr.mxu0 0.0
  %695 = vmatpush1.msra.mxu0 0.0
  %696 = vmatprep.subr.mxu0 0.0
  %697 = vmatpush1.msra.mxu0 0.0
  %698 = vmatprep.subr.mxu0 0.0
  %699 = vmatpush1.msra.mxu0 0.0
  %700 = vmatprep.subr.mxu0 0.0
  %701 = vmatpush1.msra.mxu0 0.0
  %702 = vmatprep.subr.mxu0 0.0
  %703 = vmatpush1.msra.mxu0 0.0
  %704 = vmatprep.subr.mxu0 0.0
  %705 = vmatpush1.msra.mxu0 0.0
  %706 = vmatprep.subr.mxu0 0.0
  %707 = vmatpush1.msra.mxu0 0.0
  %708 = vmatprep.subr.mxu0 0.0
  %709 = vmatpush1.msra.mxu0 0.0
  %710 = vmatprep.subr.mxu0 0.0
  %711 = vmatpush1.msra.mxu0 0.0
  %712 = vmatprep.subr.mxu0 0.0
  %713 = vmatpush1.msra.mxu0 0.0
  %714 = vmatprep.subr.mxu0 0.0
  %715 = vmatpush1.msra.mxu0 0.0
  %716 = vmatprep.subr.mxu0 0.0
  %717 = vmatpush1.msra.mxu0 0.0
  %718 = vmatprep.subr.mxu0 0.0
  %719 = vmatpush1.msra.mxu0 0.0
  %720 = vmatprep.subr.mxu0 0.0
  %721 = vmatpush1.msra.mxu0 0.0
  %722 = vmatprep.subr.mxu0 0.0
  %723 = vmatpush1.msra.mxu0 0.0
  %724 = vmatprep.subr.mxu0 0.0
  %725 = vmatpush1.msra.mxu0 0.0
  %726 = vmatprep.subr.mxu0 0.0
  %727 = vmatpush1.msra.mxu0 0.0
  %728 = vmatprep.subr.mxu0 0.0
  %729 = vmatpush1.msra.mxu0 0.0
  %730 = vmatprep.subr.mxu0 0.0
  %731 = vmatpush1.msra.mxu0 0.0
  %732 = vmatprep.subr.mxu0 0.0
  %733 = vmatpush1.msra.mxu0 0.0
  %734 = vmatprep.subr.mxu0 0.0
  %735 = vmatpush1.msra.mxu0 0.0
  %736 = vmatprep.subr.mxu0 0.0
  %737 = vmatpush1.msra.mxu0 0.0
  %738 = vmatprep.mubr.f32.mxu0 0.0
  %739 = vmatmul.mubr.f32.gmra.mrb[0].mxu0 %v672
  %v740 = vpop.f32.mrb[0].mxu0
  %v741 = vadd.f32 0.0, %v740
  %v742 = vpop.f32.mrb[0].mxu0
  %743 = vdwg.mxu0
  %v745 = vsel %vm670, %v44, 0
  %747 = vmatprep.subr.mxu0 0.0
  %748 = vmatpush1.msra.mxu0 %v665
  %749 = vmatprep.subr.mxu0 0.0
  %750 = vmatpush1.msra.mxu0 0.0
  %751 = vmatprep.subr.mxu0 0.0
  %752 = vmatpush1.msra.mxu0 0.0
  %753 = vmatprep.subr.mxu0 0.0
  %754 = vmatpush1.msra.mxu0 0.0
  %755 = vmatprep.subr.mxu0 0.0
  %756 = vmatpush1.msra.mxu0 0.0
  %757 = vmatprep.subr.mxu0 0.0
  %758 = vmatpush1.msra.mxu0 0.0
  %759 = vmatprep.subr.mxu0 0.0
  %760 = vmatpush1.msra.mxu0 0.0
  %761 = vmatprep.subr.mxu0 0.0
  %762 = vmatpush1.msra.mxu0 0.0
  %763 = vmatprep.subr.mxu0 0.0
  %764 = vmatpush1.msra.mxu0 0.0
  %765 = vmatprep.subr.mxu0 0.0
  %766 = vmatpush1.msra.mxu0 0.0
  %767 = vmatprep.subr.mxu0 0.0
  %768 = vmatpush1.msra.mxu0 0.0
  %769 = vmatprep.subr.mxu0 0.0
  %770 = vmatpush1.msra.mxu0 0.0
  %771 = vmatprep.subr.mxu0 0.0
  %772 = vmatpush1.msra.mxu0 0.0
  %773 = vmatprep.subr.mxu0 0.0
  %774 = vmatpush1.msra.mxu0 0.0
  %775 = vmatprep.subr.mxu0 0.0
  %776 = vmatpush1.msra.mxu0 0.0
  %777 = vmatprep.subr.mxu0 0.0
  %778 = vmatpush1.msra.mxu0 0.0
  %779 = vmatprep.subr.mxu0 0.0
  %780 = vmatpush1.msra.mxu0 0.0
  %781 = vmatprep.subr.mxu0 0.0
  %782 = vmatpush1.msra.mxu0 0.0
  %783 = vmatprep.subr.mxu0 0.0
  %784 = vmatpush1.msra.mxu0 0.0
  %785 = vmatprep.subr.mxu0 0.0
  %786 = vmatpush1.msra.mxu0 0.0
  %787 = vmatprep.subr.mxu0 0.0
  %788 = vmatpush1.msra.mxu0 0.0
  %789 = vmatprep.subr.mxu0 0.0
  %790 = vmatpush1.msra.mxu0 0.0
  %791 = vmatprep.subr.mxu0 0.0
  %792 = vmatpush1.msra.mxu0 0.0
  %793 = vmatprep.subr.mxu0 0.0
  %794 = vmatpush1.msra.mxu0 0.0
  %795 = vmatprep.subr.mxu0 0.0
  %796 = vmatpush1.msra.mxu0 0.0
  %797 = vmatprep.subr.mxu0 0.0
  %798 = vmatpush1.msra.mxu0 0.0
  %799 = vmatprep.subr.mxu0 0.0
  %800 = vmatpush1.msra.mxu0 0.0
  %801 = vmatprep.subr.mxu0 0.0
  %802 = vmatpush1.msra.mxu0 0.0
  %803 = vmatprep.subr.mxu0 0.0
  %804 = vmatpush1.msra.mxu0 0.0
  %805 = vmatprep.subr.mxu0 0.0
  %806 = vmatpush1.msra.mxu0 0.0
  %807 = vmatprep.subr.mxu0 0.0
  %808 = vmatpush1.msra.mxu0 0.0
  %809 = vmatprep.subr.mxu0 0.0
  %810 = vmatpush1.msra.mxu0 0.0
  %811 = vmatprep.mubr.f32.mxu0 0.0
  %812 = vmatmul.mubr.f32.gmra.mrb[0].mxu0 %v745
  %v813 = vpop.f32.mrb[0].mxu0
  %v814 = vadd.f32 %v741, %v813
  %v815 = vpop.f32.mrb[0].mxu0
  %816 = vdwg.mxu0
  %v818 = vsel %vm670, %v54, 0
  %820 = vmatprep.subr.mxu0 0.0
  %821 = vmatpush1.msra.mxu0 %v669
  %822 = vmatprep.subr.mxu0 0.0
  %823 = vmatpush1.msra.mxu0 0.0
  %824 = vmatprep.subr.mxu0 0.0
  %825 = vmatpush1.msra.mxu0 0.0
  %826 = vmatprep.subr.mxu0 0.0
  %827 = vmatpush1.msra.mxu0 0.0
  %828 = vmatprep.subr.mxu0 0.0
  %829 = vmatpush1.msra.mxu0 0.0
  %830 = vmatprep.subr.mxu0 0.0
  %831 = vmatpush1.msra.mxu0 0.0
  %832 = vmatprep.subr.mxu0 0.0
  %833 = vmatpush1.msra.mxu0 0.0
  %834 = vmatprep.subr.mxu0 0.0
  %835 = vmatpush1.msra.mxu0 0.0
  %836 = vmatprep.subr.mxu0 0.0
  %837 = vmatpush1.msra.mxu0 0.0
  %838 = vmatprep.subr.mxu0 0.0
  %839 = vmatpush1.msra.mxu0 0.0
  %840 = vmatprep.subr.mxu0 0.0
  %841 = vmatpush1.msra.mxu0 0.0
  %842 = vmatprep.subr.mxu0 0.0
  %843 = vmatpush1.msra.mxu0 0.0
  %844 = vmatprep.subr.mxu0 0.0
  %845 = vmatpush1.msra.mxu0 0.0
  %846 = vmatprep.subr.mxu0 0.0
  %847 = vmatpush1.msra.mxu0 0.0
  %848 = vmatprep.subr.mxu0 0.0
  %849 = vmatpush1.msra.mxu0 0.0
  %850 = vmatprep.subr.mxu0 0.0
  %851 = vmatpush1.msra.mxu0 0.0
  %852 = vmatprep.subr.mxu0 0.0
  %853 = vmatpush1.msra.mxu0 0.0
  %854 = vmatprep.subr.mxu0 0.0
  %855 = vmatpush1.msra.mxu0 0.0
  %856 = vmatprep.subr.mxu0 0.0
  %857 = vmatpush1.msra.mxu0 0.0
  %858 = vmatprep.subr.mxu0 0.0
  %859 = vmatpush1.msra.mxu0 0.0
  %860 = vmatprep.subr.mxu0 0.0
  %861 = vmatpush1.msra.mxu0 0.0
  %862 = vmatprep.subr.mxu0 0.0
  %863 = vmatpush1.msra.mxu0 0.0
  %864 = vmatprep.subr.mxu0 0.0
  %865 = vmatpush1.msra.mxu0 0.0
  %866 = vmatprep.subr.mxu0 0.0
  %867 = vmatpush1.msra.mxu0 0.0
  %868 = vmatprep.subr.mxu0 0.0
  %869 = vmatpush1.msra.mxu0 0.0
  %870 = vmatprep.subr.mxu0 0.0
  %871 = vmatpush1.msra.mxu0 0.0
  %872 = vmatprep.subr.mxu0 0.0
  %873 = vmatpush1.msra.mxu0 0.0
  %874 = vmatprep.subr.mxu0 0.0
  %875 = vmatpush1.msra.mxu0 0.0
  %876 = vmatprep.subr.mxu0 0.0
  %877 = vmatpush1.msra.mxu0 0.0
  %878 = vmatprep.subr.mxu0 0.0
  %879 = vmatpush1.msra.mxu0 0.0
  %880 = vmatprep.subr.mxu0 0.0
  %881 = vmatpush1.msra.mxu0 0.0
  %882 = vmatprep.subr.mxu0 0.0
  %883 = vmatpush1.msra.mxu0 0.0
  %884 = vmatprep.mubr.f32.mxu0 0.0
  %885 = vmatmul.mubr.f32.gmra.mrb[0].mxu0 %v818
  %v886 = vpop.f32.mrb[0].mxu0
  %v887 = vadd.f32 0.0, %v886
  %v888 = vpop.f32.mrb[0].mxu0
  %889 = vdwg.mxu0
  %v890 = vadd.f32 %v814, %v887
  %v891 = vmul.f32 %v610, %v645
  %v892 = vadd.f32 %v891, %v651
  %v893 = vmax.f32 %v892, 0.0
  %894 = vrot.lane.b32.xlu0 %v893, 16
  %v895 = vpop.permute.xlu0 %894
  %v896 = vsel %vm105, %v895, %v893
  %897 = vrot.lane.b32.xlu0 %v896, 16
  %v898 = vpop.permute.xlu0 %897
  %v899 = vsel %vm105, %v898, %v893
  %901 = vrot.lane.b32.xlu0 %v899, 113
  %v902 = vpop.permute.xlu0 %901
  %v904 = vsel %vm113, 0.0, %v902
  %905 = vrot.lane.b32.xlu0 %v899, 127
  %v906 = vpop.permute.xlu0 %905
  %v908 = vsel %vm121, 0.0, %v906
  %909 = vmatprep.subr.mxu0 0.0
  %910 = vmatpush1.msra.mxu0 %v893
  %911 = vmatprep.subr.mxu0 0.0
  %912 = vmatpush1.msra.mxu0 0.0
  %913 = vmatprep.subr.mxu0 0.0
  %914 = vmatpush1.msra.mxu0 0.0
  %915 = vmatprep.subr.mxu0 0.0
  %916 = vmatpush1.msra.mxu0 0.0
  %917 = vmatprep.subr.mxu0 0.0
  %918 = vmatpush1.msra.mxu0 0.0
  %919 = vmatprep.subr.mxu0 0.0
  %920 = vmatpush1.msra.mxu0 0.0
  %921 = vmatprep.subr.mxu0 0.0
  %922 = vmatpush1.msra.mxu0 0.0
  %923 = vmatprep.subr.mxu0 0.0
  %924 = vmatpush1.msra.mxu0 0.0
  %925 = vmatprep.subr.mxu0 0.0
  %926 = vmatpush1.msra.mxu0 0.0
  %927 = vmatprep.subr.mxu0 0.0
  %928 = vmatpush1.msra.mxu0 0.0
  %929 = vmatprep.subr.mxu0 0.0
  %930 = vmatpush1.msra.mxu0 0.0
  %931 = vmatprep.subr.mxu0 0.0
  %932 = vmatpush1.msra.mxu0 0.0
  %933 = vmatprep.subr.mxu0 0.0
  %934 = vmatpush1.msra.mxu0 0.0
  %935 = vmatprep.subr.mxu0 0.0
  %936 = vmatpush1.msra.mxu0 0.0
  %937 = vmatprep.subr.mxu0 0.0
  %938 = vmatpush1.msra.mxu0 0.0
  %939 = vmatprep.subr.mxu0 0.0
  %940 = vmatpush1.msra.mxu0 0.0
  %941 = vmatprep.subr.mxu0 0.0
  %942 = vmatpush1.msra.mxu0 0.0
  %943 = vmatprep.subr.mxu0 0.0
  %944 = vmatpush1.msra.mxu0 0.0
  %945 = vmatprep.subr.mxu0 0.0
  %946 = vmatpush1.msra.mxu0 0.0
  %947 = vmatprep.subr.mxu0 0.0
  %948 = vmatpush1.msra.mxu0 0.0
  %949 = vmatprep.subr.mxu0 0.0
  %950 = vmatpush1.msra.mxu0 0.0
  %951 = vmatprep.subr.mxu0 0.0
  %952 = vmatpush1.msra.mxu0 0.0
  %953 = vmatprep.subr.mxu0 0.0
  %954 = vmatpush1.msra.mxu0 0.0
  %955 = vmatprep.subr.mxu0 0.0
  %956 = vmatpush1.msra.mxu0 0.0
  %957 = vmatprep.subr.mxu0 0.0
  %958 = vmatpush1.msra.mxu0 0.0
  %959 = vmatprep.subr.mxu0 0.0
  %960 = vmatpush1.msra.mxu0 0.0
  %961 = vmatprep.subr.mxu0 0.0
  %962 = vmatpush1.msra.mxu0 0.0
  %963 = vmatprep.subr.mxu0 0.0
  %964 = vmatpush1.msra.mxu0 0.0
  %965 = vmatprep.subr.mxu0 0.0
  %966 = vmatpush1.msra.mxu0 0.0
  %967 = vmatprep.subr.mxu0 0.0
  %968 = vmatpush1.msra.mxu0 0.0
  %969 = vmatprep.subr.mxu0 0.0
  %970 = vmatpush1.msra.mxu0 0.0
  %971 = vmatprep.subr.mxu0 0.0
  %972 = vmatpush1.msra.mxu0 0.0
  %973 = vmatprep.mubr.f32.mxu0 0.0
  %974 = vmatmul.mubr.f32.gmra.mrb[0].mxu0 %v672
  %v975 = vpop.f32.mrb[0].mxu0
  %v976 = vadd.f32 0.0, %v975
  %v977 = vpop.f32.mrb[0].mxu0
  %978 = vdwg.mxu0
  %979 = vmatprep.subr.mxu0 0.0
  %980 = vmatpush1.msra.mxu0 %v904
  %981 = vmatprep.subr.mxu0 0.0
  %982 = vmatpush1.msra.mxu0 0.0
  %983 = vmatprep.subr.mxu0 0.0
  %984 = vmatpush1.msra.mxu0 0.0
  %985 = vmatprep.subr.mxu0 0.0
  %986 = vmatpush1.msra.mxu0 0.0
  %987 = vmatprep.subr.mxu0 0.0
  %988 = vmatpush1.msra.mxu0 0.0
  %989 = vmatprep.subr.mxu0 0.0
  %990 = vmatpush1.msra.mxu0 0.0
  %991 = vmatprep.subr.mxu0 0.0
  %992 = vmatpush1.msra.mxu0 0.0
  %993 = vmatprep.subr.mxu0 0.0
  %994 = vmatpush1.msra.mxu0 0.0
  %995 = vmatprep.subr.mxu0 0.0
  %996 = vmatpush1.msra.mxu0 0.0
  %997 = vmatprep.subr.mxu0 0.0
  %998 = vmatpush1.msra.mxu0 0.0
  %999 = vmatprep.subr.mxu0 0.0
  %1000 = vmatpush1.msra.mxu0 0.0
  %1001 = vmatprep.subr.mxu0 0.0
  %1002 = vmatpush1.msra.mxu0 0.0
  %1003 = vmatprep.subr.mxu0 0.0
  %1004 = vmatpush1.msra.mxu0 0.0
  %1005 = vmatprep.subr.mxu0 0.0
  %1006 = vmatpush1.msra.mxu0 0.0
  %1007 = vmatprep.subr.mxu0 0.0
  %1008 = vmatpush1.msra.mxu0 0.0
  %1009 = vmatprep.subr.mxu0 0.0
  %1010 = vmatpush1.msra.mxu0 0.0
  %1011 = vmatprep.subr.mxu0 0.0
  %1012 = vmatpush1.msra.mxu0 0.0
  %1013 = vmatprep.subr.mxu0 0.0
  %1014 = vmatpush1.msra.mxu0 0.0
  %1015 = vmatprep.subr.mxu0 0.0
  %1016 = vmatpush1.msra.mxu0 0.0
  %1017 = vmatprep.subr.mxu0 0.0
  %1018 = vmatpush1.msra.mxu0 0.0
  %1019 = vmatprep.subr.mxu0 0.0
  %1020 = vmatpush1.msra.mxu0 0.0
  %1021 = vmatprep.subr.mxu0 0.0
  %1022 = vmatpush1.msra.mxu0 0.0
  %1023 = vmatprep.subr.mxu0 0.0
  %1024 = vmatpush1.msra.mxu0 0.0
  %1025 = vmatprep.subr.mxu0 0.0
  %1026 = vmatpush1.msra.mxu0 0.0
  %1027 = vmatprep.subr.mxu0 0.0
  %1028 = vmatpush1.msra.mxu0 0.0
  %1029 = vmatprep.subr.mxu0 0.0
  %1030 = vmatpush1.msra.mxu0 0.0
  %1031 = vmatprep.subr.mxu0 0.0
  %1032 = vmatpush1.msra.mxu0 0.0
  %1033 = vmatprep.subr.mxu0 0.0
  %1034 = vmatpush1.msra.mxu0 0.0
  %1035 = vmatprep.subr.mxu0 0.0
  %1036 = vmatpush1.msra.mxu0 0.0
  %1037 = vmatprep.subr.mxu0 0.0
  %1038 = vmatpush1.msra.mxu0 0.0
  %1039 = vmatprep.subr.mxu0 0.0
  %1040 = vmatpush1.msra.mxu0 0.0
  %1041 = vmatprep.subr.mxu0 0.0
  %1042 = vmatpush1.msra.mxu0 0.0
  %1043 = vmatprep.mubr.f32.mxu0 0.0
  %1044 = vmatmul.mubr.f32.gmra.mrb[0].mxu0 %v745
  %v1045 = vpop.f32.mrb[0].mxu0
  %v1046 = vadd.f32 %v976, %v1045
  %v1047 = vpop.f32.mrb[0].mxu0
  %1048 = vdwg.mxu0
  %1049 = vmatprep.subr.mxu0 0.0
  %1050 = vmatpush1.msra.mxu0 %v908
  %1051 = vmatprep.subr.mxu0 0.0
  %1052 = vmatpush1.msra.mxu0 0.0
  %1053 = vmatprep.subr.mxu0 0.0
  %1054 = vmatpush1.msra.mxu0 0.0
  %1055 = vmatprep.subr.mxu0 0.0
  %1056 = vmatpush1.msra.mxu0 0.0
  %1057 = vmatprep.subr.mxu0 0.0
  %1058 = vmatpush1.msra.mxu0 0.0
  %1059 = vmatprep.subr.mxu0 0.0
  %1060 = vmatpush1.msra.mxu0 0.0
  %1061 = vmatprep.subr.mxu0 0.0
  %1062 = vmatpush1.msra.mxu0 0.0
  %1063 = vmatprep.subr.mxu0 0.0
  %1064 = vmatpush1.msra.mxu0 0.0
  %1065 = vmatprep.subr.mxu0 0.0
  %1066 = vmatpush1.msra.mxu0 0.0
  %1067 = vmatprep.subr.mxu0 0.0
  %1068 = vmatpush1.msra.mxu0 0.0
  %1069 = vmatprep.subr.mxu0 0.0
  %1070 = vmatpush1.msra.mxu0 0.0
  %1071 = vmatprep.subr.mxu0 0.0
  %1072 = vmatpush1.msra.mxu0 0.0
  %1073 = vmatprep.subr.mxu0 0.0
  %1074 = vmatpush1.msra.mxu0 0.0
  %1075 = vmatprep.subr.mxu0 0.0
  %1076 = vmatpush1.msra.mxu0 0.0
  %1077 = vmatprep.subr.mxu0 0.0
  %1078 = vmatpush1.msra.mxu0 0.0
  %1079 = vmatprep.subr.mxu0 0.0
  %1080 = vmatpush1.msra.mxu0 0.0
  %1081 = vmatprep.subr.mxu0 0.0
  %1082 = vmatpush1.msra.mxu0 0.0
  %1083 = vmatprep.subr.mxu0 0.0
  %1084 = vmatpush1.msra.mxu0 0.0
  %1085 = vmatprep.subr.mxu0 0.0
  %1086 = vmatpush1.msra.mxu0 0.0
  %1087 = vmatprep.subr.mxu0 0.0
  %1088 = vmatpush1.msra.mxu0 0.0
  %1089 = vmatprep.subr.mxu0 0.0
  %1090 = vmatpush1.msra.mxu0 0.0
  %1091 = vmatprep.subr.mxu0 0.0
  %1092 = vmatpush1.msra.mxu0 0.0
  %1093 = vmatprep.subr.mxu0 0.0
  %1094 = vmatpush1.msra.mxu0 0.0
  %1095 = vmatprep.subr.mxu0 0.0
  %1096 = vmatpush1.msra.mxu0 0.0
  %1097 = vmatprep.subr.mxu0 0.0
  %1098 = vmatpush1.msra.mxu0 0.0
  %1099 = vmatprep.subr.mxu0 0.0
  %1100 = vmatpush1.msra.mxu0 0.0
  %1101 = vmatprep.subr.mxu0 0.0
  %1102 = vmatpush1.msra.mxu0 0.0
  %1103 = vmatprep.subr.mxu0 0.0
  %1104 = vmatpush1.msra.mxu0 0.0
  %1105 = vmatprep.subr.mxu0 0.0
  %1106 = vmatpush1.msra.mxu0 0.0
  %1107 = vmatprep.subr.mxu0 0.0
  %1108 = vmatpush1.msra.mxu0 0.0
  %1109 = vmatprep.subr.mxu0 0.0
  %1110 = vmatpush1.msra.mxu0 0.0
  %1111 = vmatprep.subr.mxu0 0.0
  %1112 = vmatpush1.msra.mxu0 0.0
  %1113 = vmatprep.mubr.f32.mxu0 0.0
  %1114 = vmatmul.mubr.f32.gmra.mrb[0].mxu0 %v818
  %v1115 = vpop.f32.mrb[0].mxu0
  %v1116 = vadd.f32 0.0, %v1115
  %v1117 = vpop.f32.mrb[0].mxu0
  %1118 = vdwg.mxu0
  %v1119 = vadd.f32 %v1046, %v1116
  %v1120 = vadd.f32 %v890, %v370
  %v1121 = vadd.f32 %v1119, %v611
  %v1122 = vsel %vm612, %v1120, 0.0
  %1123 = vadd.xlane.f32.xlu0 %v1122
  %v1124 = vpop.xlane.xlu0 %1123
  %v1125 = vmul.f32 %v1120, %v1120
  %v1126 = vsel %vm612, %v1125, 0.0
  %1127 = vadd.xlane.f32.xlu0 %v1126
  %v1128 = vpop.xlane.xlu0 %1127
  %v1129 = vsel %vm612, %v1121, 0.0
  %1130 = vadd.xlane.f32.xlu0 %v1129
  %v1131 = vpop.xlane.xlu0 %1130
  %v1132 = vadd.f32 %v1124, %v1131
  %v1133 = vmul.f32 %v1121, %v1121
  %v1134 = vsel %vm612, %v1133, 0.0
  %1135 = vadd.xlane.f32.xlu0 %v1134
  %v1136 = vpop.xlane.xlu0 %1135
  %v1137 = vadd.f32 %v1128, %v1136
  %v1138 = vmul.f32 %v1132, 0.03125
  %v1139 = vmul.f32 %v1137, 0.03125
  %v1140 = vmul.f32 %v1138, %v1138
  %v1141 = vsub.f32 %v1139, %v1140
  %v1142 = vadd.f32 %v1141, 1e-05
  %v1143 = vrsqrt.pop %v1142
  %v1144 = vmul.f32 %v1143, %v24
  %v1145 = vmul.f32 %v1138, %v1144
  %1147 = vrot.lane.b32.xlu0 %v1145, 1
  %v1148 = vpop.permute.xlu0 %1147
  %v1150 = vsub.f32 %v24, %v1148
  %1152 = vset.pattern.permute.xlu0 5
  %1153 = vperm.xlu0 %1152, %v1144
  %v1154 = vpop.permute.xlu0 %1153
  %v1156 = vmul.f32 %v1120, %v1154
  %1158 = vset.pattern.permute.xlu0 6
  %1159 = vperm.xlu0 %1158, %v1150
  %v1160 = vpop.permute.xlu0 %1159
  %v1162 = vadd.f32 %v1156, %v1160
  %v1163 = vmax.f32 %v1162, 0.0
  %v1164 = vsel %vm612, %v1163, -inf
  %1165 = vmax.xlane.f32.xlu0 %v1164
  %v1166 = vpop.xlane.xlu0 %1165
  %vm1167 = vcmask 7168
  %1168 = vst.msk [vmem:[%s5] sm:$0xff] %vm1167, %v1166
  %v1169 = vmul.f32 %v1121, %v1154
  %v1170 = vadd.f32 %v1169, %v1160
  %v1171 = vmax.f32 %v1170, 0.0
  %v1172 = vsel %vm612, %v1171, -inf
  %1173 = vmax.xlane.f32.xlu0 %v1172
  %v1174 = vpop.xlane.xlu0 %1173
  %s1175 = scalar_lea.vmem %s5, 8
  %1176 = vst.msk [vmem:[%s1175] sm:$0xff] %vm1167, %v1174
  // Predicated region
  $region22: #{tpu_custom_call.1} parent=0 // pred_check
    _
  $region23: #{tpu_custom_call.1} parent=0 // pred_check_branch
    %1178 = sbr.rel (0) target = $region25
  $region24: #{tpu_custom_call.1} parent=0 // pred_region
    _
  $region25: #{tpu_custom_call.1} parent=0 // pred_fallthru
    _
  // Predicated region
  $region26: #{tpu_custom_call.1} parent=0 // pred_check
    _
  $region27: #{tpu_custom_call.1} parent=0 // pred_check_branch
    %1180 = sbr.rel (0) target = $region29
  $region28: #{tpu_custom_call.1} parent=0 // pred_region
    _
  $region29: #{tpu_custom_call.1} parent=0 // pred_fallthru
    _

</llo_original>
